<compile_context>
chip_gen: v6e
topology: v6e:2x2x1
jax: 0.10.0
libtpu: 0.0.40
codegen_flags: <defaults>
</compile_context>

<pallas_src>
import math
import functools

import jax
import jax.numpy as jnp
from jax.experimental import pallas as pl
from jax.experimental.pallas import tpu as pltpu


def _round_up(n, m):
    return ((n + m - 1) // m) * m


def _nerf_kernel(x_ref, w0t_ref, b0_ref, wht_ref, bh_ref, wft_ref, bf_ref,
                 o_ref, pe_ref, *, freq_num, scale, layer_num, d_in):
    """One (D, tn) column tile of inputs -> one (1, tn) tile of outputs."""
    D = d_in
    x = x_ref[...].astype(jnp.float32)                       # (D, tn), lane-dense

    # Positional encoding written straight into the (d_pe, tn) VMEM scratch at
    # static sublane offsets, in the reference feature order:
    #   [x, sin(pi x/s), cos(pi x/s), sin(2 pi x/s), cos(2 pi x/s), ...]
    pe_ref[0:D, :] = x
    if freq_num > 0:
        base = (math.pi / scale) * x                          # hoisted scaling
        s = jnp.sin(base)                                     # EUP, once
        c = jnp.cos(base)                                     # EUP, once
        pe_ref[D:2 * D, :] = s
        pe_ref[2 * D:3 * D, :] = c
        for f in range(1, freq_num):
            # Frequencies are exact powers of two -> double-angle recurrence
            # (pure VPU muls instead of more EUP transcendentals).
            s, c = 2.0 * s * c, 1.0 - 2.0 * (s * s)
            pe_ref[(2 * f + 1) * D:(2 * f + 2) * D, :] = s
            pe_ref[(2 * f + 2) * D:(2 * f + 3) * D, :] = c

    # MLP, feature-major: h_T = W^T @ h_T.  bf16 MXU operands, f32 accumulate;
    # bias + ReLU on the VPU in f32.
    pe = pe_ref[...].astype(jnp.bfloat16)                     # (d_pe, tn)
    h = jnp.dot(w0t_ref[...], pe, preferred_element_type=jnp.float32)
    h = jnp.maximum(h + b0_ref[...], 0.0)                     # (H, tn) f32
    for l in range(layer_num):
        h = jnp.dot(wht_ref[l], h.astype(jnp.bfloat16),
                    preferred_element_type=jnp.float32)
        h = jnp.maximum(h + bh_ref[l], 0.0)
    # Final 256 -> 1 layer: M=1 matmul, nearly free in this layout.
    out = jnp.dot(wft_ref[...], h.astype(jnp.bfloat16),
                  preferred_element_type=jnp.float32) + bf_ref[...]
    o_ref[...] = out.astype(o_ref.dtype)                      # (1, tn) lane-dense


def nerf_forward(x, params, *, freq_num, scale=1.0, row_tile=2048):
    """Fused Pallas forward of NerfWithPositionEncoding.

    x: (..., D) with D * (1 + 2*freq_num) == params['w0'].shape[0].
    Returns (..., 1).
    """
    w0, b0 = params["w0"], params["b0"]
    wh, bh = params["wh"], params["bh"]
    wf, bf = params["wf"], params["bf"]

    orig_shape = x.shape
    D = orig_shape[-1]
    d_pe = D * (1 + 2 * freq_num)
    assert w0.shape[0] == d_pe, (w0.shape, d_pe)
    H = w0.shape[1]
    L = int(wh.shape[0])

    x2 = x.reshape(-1, D)
    N = x2.shape[0]

    # Lane-dense column tiles (multiple of 128).  Cap the tile so the grid has
    # at least two steps whenever there is enough work (keeps both v7x
    # TensorCores busy under dimension_semantics=("parallel",)).
    tn_cap = max(128, _round_up(int(row_tile), 128))
    tn = min(tn_cap, max(128, _round_up((N + 1) // 2, 128)))
    Np = _round_up(N, tn)

    # Feature-major input (D, Np).  The transpose is the only relayout; the
    # (< tn) zero-padding fuses into the same XLA copy and padded columns only
    # produce outputs that are sliced away below.
    x_t = jnp.pad(x2, ((0, Np - N), (0, 0))).T

    # Weights hit the MXU in bf16 (f32 accumulation); biases stay f32.
    w0t = w0.T.astype(jnp.bfloat16)                           # (H, d_pe)
    wht = jnp.transpose(wh, (0, 2, 1)).astype(jnp.bfloat16)   # (L, H, H)
    wft = wf.T.astype(jnp.bfloat16)                           # (1, H)
    b0c = b0.reshape(H, 1).astype(jnp.float32)
    bhc = bh.reshape(L, H, 1).astype(jnp.float32)
    bfc = bf.reshape(1, 1).astype(jnp.float32)

    kernel = functools.partial(_nerf_kernel, freq_num=int(freq_num),
                               scale=float(scale), layer_num=L, d_in=D)

    out = pl.pallas_call(
        kernel,
        out_shape=jax.ShapeDtypeStruct((1, Np), x.dtype),
        grid_spec=pltpu.PrefetchScalarGridSpec(
            num_scalar_prefetch=0,
            grid=(Np // tn,),
            in_specs=[
                pl.BlockSpec((D, tn), lambda i: (0, i)),        # x tile (D, tn)
                pl.BlockSpec((H, d_pe), lambda i: (0, 0)),      # W0^T (resident)
                pl.BlockSpec((H, 1), lambda i: (0, 0)),         # b0
                pl.BlockSpec((L, H, H), lambda i: (0, 0, 0)),   # hidden W^T
                pl.BlockSpec((L, H, 1), lambda i: (0, 0, 0)),   # hidden b
                pl.BlockSpec((1, H), lambda i: (0, 0)),         # W_final^T
                pl.BlockSpec((1, 1), lambda i: (0, 0)),         # b_final
            ],
            out_specs=pl.BlockSpec((1, tn), lambda i: (0, i)),
            scratch_shapes=[pltpu.VMEM((d_pe, tn), jnp.float32)],
        ),
        compiler_params=pltpu.CompilerParams(
            dimension_semantics=("parallel",),
            vmem_limit_bytes=40 * 1024 * 1024,
        ),
    )(x_t, w0t, b0c, wht, bhc, wft, bfc)

    return out[0, :N].reshape(*orig_shape[:-1], 1)


def init_params(key, *, freq_num, layer_num, hidden_dim, d_in=3):
    """Deterministic Linear-layer params (uniform +/- 1/sqrt(fan_in), like torch)."""
    d_pe = d_in * (1 + 2 * freq_num)
    ks = jax.random.split(key, 2 * (layer_num + 2))

    def linear(kw, kb, fan_in, fan_out):
        lim = 1.0 / math.sqrt(fan_in)
        w = jax.random.uniform(kw, (fan_in, fan_out), jnp.float32, -lim, lim)
        b = jax.random.uniform(kb, (fan_out,), jnp.float32, -lim, lim)
        return w, b

    w0, b0 = linear(ks[0], ks[1], d_pe, hidden_dim)
    whs, bhs = [], []
    for l in range(layer_num):
        w, b = linear(ks[2 + 2 * l], ks[3 + 2 * l], hidden_dim, hidden_dim)
        whs.append(w)
        bhs.append(b)
    wf, bf = linear(ks[2 + 2 * layer_num], ks[3 + 2 * layer_num], hidden_dim, 1)
    return {"w0": w0, "b0": b0,
            "wh": jnp.stack(whs, 0), "bh": jnp.stack(bhs, 0),
            "wf": wf, "bf": bf}


def _reference_forward(x, params, *, freq_num, scale):
    # Pure-JAX f32 reference matching the PyTorch forward exactly.
    x_in = x
    h = x
    for i in range(freq_num):
        f = float(2 ** i)
        h = jnp.concatenate([h,
                             jnp.sin(f * math.pi * x_in / scale),
                             jnp.cos(f * math.pi * x_in / scale)], axis=-1)
    h = jnp.maximum(h @ params["w0"] + params["b0"], 0.0)
    for l in range(params["wh"].shape[0]):
        h = jnp.maximum(h @ params["wh"][l] + params["bh"][l], 0.0)
    return h @ params["wf"] + params["bf"]


if __name__ == "__main__":
    key = jax.random.PRNGKey(0)
    freq_num, scale, layer_num, hidden_dim = 4, 1.0, 3, 256
    B, V, D = 2, 128, 3                       # small batch of 3-D vertex positions

    kx, kp = jax.random.split(key)
    x = jax.random.normal(kx, (B, V, D), dtype=jnp.float32)
    params = init_params(kp, freq_num=freq_num, layer_num=layer_num,
                         hidden_dim=hidden_dim, d_in=D)

    y = nerf_forward(x, params, freq_num=freq_num, scale=scale)
    y = jax.block_until_ready(y)

    y_ref = _reference_forward(x, params, freq_num=freq_num, scale=scale)
    assert y.shape == (B, V, 1), y.shape
    max_err = float(jnp.max(jnp.abs(y - y_ref)))
    # Kernel uses bf16 MXU operands (f32 accumulation), so the tolerance vs the
    # exact f32 reference is loosened per the perf review's correctness note.
    assert jnp.allclose(y, y_ref, atol=2e-2, rtol=2e-2), f"mismatch: {max_err}"

    print("KERNEL_OK")
</pallas_src>

<mosaic_0001>
module attributes {stable_mosaic.version = 11 : i64} {
  func.func @_nerf_kernel(%arg0: i32, %arg1: memref<3x128xf32, #tpu.memory_space<vmem>>, %arg2: memref<256x27xbf16, #tpu.memory_space<vmem>>, %arg3: memref<256x1xf32, #tpu.memory_space<vmem>>, %arg4: memref<3x256x256xbf16, #tpu.memory_space<vmem>>, %arg5: memref<3x256x1xf32, #tpu.memory_space<vmem>>, %arg6: memref<1x256xbf16, #tpu.memory_space<vmem>>, %arg7: memref<1x1xf32, #tpu.memory_space<vmem>>, %arg8: memref<1x128xf32, #tpu.memory_space<vmem>>, %arg9: memref<27x128xf32, #tpu.memory_space<vmem>>) attributes {dimension_semantics = [#tpu.dimension_semantics<parallel>], iteration_bounds = array<i64: 2>, scalar_prefetch = 0 : i64, scratch_operands = 1 : i64, tpu.core_type = #tpu.core_type<tc>, window_params = [{transform_indices = @transform_0, window_bounds = array<i64: 3, 128>}, {pipeline_mode = #tpu.pipeline_mode<synchronous>, transform_indices = @transform_1, window_bounds = array<i64: 256, 27>}, {pipeline_mode = #tpu.pipeline_mode<synchronous>, transform_indices = @transform_2, window_bounds = array<i64: 256, 1>}, {pipeline_mode = #tpu.pipeline_mode<synchronous>, transform_indices = @transform_3, window_bounds = array<i64: 3, 256, 256>}, {pipeline_mode = #tpu.pipeline_mode<synchronous>, transform_indices = @transform_4, window_bounds = array<i64: 3, 256, 1>}, {pipeline_mode = #tpu.pipeline_mode<synchronous>, transform_indices = @transform_5, window_bounds = array<i64: 1, 256>}, {pipeline_mode = #tpu.pipeline_mode<synchronous>, transform_indices = @transform_6, window_bounds = array<i64: 1, 1>}, {transform_indices = @transform_7, window_bounds = array<i64: 1, 128>}]} {
    %c0 = arith.constant 0 : index
    %c0_0 = arith.constant 0 : index
    %0 = vector.load %arg1[%c0, %c0_0] : memref<3x128xf32, #tpu.memory_space<vmem>>, vector<3x128xf32>
    %c0_1 = arith.constant 0 : index
    %c0_2 = arith.constant 0 : index
    %1 = vector.load %arg9[%c0_1, %c0_2] : memref<27x128xf32, #tpu.memory_space<vmem>>, vector<3x128xf32>
    tpu.vector_store %arg9[%c0_1, %c0_2], %0 {strides = array<i32>} : memref<27x128xf32, #tpu.memory_space<vmem>>, vector<3x128xf32>,
    %cst = arith.constant 3.14159274 : f32
    %2 = vector.broadcast %cst : f32 to vector<3x128xf32>
    %3 = arith.mulf %2, %0 : vector<3x128xf32>
    %4 = math.sin %3 : vector<3x128xf32>
    %5 = math.cos %3 : vector<3x128xf32>
    %c3 = arith.constant 3 : index
    %c0_3 = arith.constant 0 : index
    %6 = vector.load %arg9[%c3, %c0_3] : memref<27x128xf32, #tpu.memory_space<vmem>>, vector<3x128xf32>
    tpu.vector_store %arg9[%c3, %c0_3], %4 {strides = array<i32>} : memref<27x128xf32, #tpu.memory_space<vmem>>, vector<3x128xf32>,
    %c6 = arith.constant 6 : index
    %c0_4 = arith.constant 0 : index
    %7 = vector.load %arg9[%c6, %c0_4] : memref<27x128xf32, #tpu.memory_space<vmem>>, vector<3x128xf32>
    tpu.vector_store %arg9[%c6, %c0_4], %5 {strides = array<i32>} : memref<27x128xf32, #tpu.memory_space<vmem>>, vector<3x128xf32>,
    %cst_5 = arith.constant 2.000000e+00 : f32
    %8 = vector.broadcast %cst_5 : f32 to vector<3x128xf32>
    %9 = arith.mulf %8, %4 : vector<3x128xf32>
    %10 = arith.mulf %9, %5 : vector<3x128xf32>
    %11 = arith.mulf %4, %4 : vector<3x128xf32>
    %cst_6 = arith.constant 2.000000e+00 : f32
    %12 = vector.broadcast %cst_6 : f32 to vector<3x128xf32>
    %13 = arith.mulf %12, %11 : vector<3x128xf32>
    %cst_7 = arith.constant 1.000000e+00 : f32
    %14 = vector.broadcast %cst_7 : f32 to vector<3x128xf32>
    %15 = arith.subf %14, %13 : vector<3x128xf32>
    %c9 = arith.constant 9 : index
    %c0_8 = arith.constant 0 : index
    %16 = vector.load %arg9[%c9, %c0_8] : memref<27x128xf32, #tpu.memory_space<vmem>>, vector<3x128xf32>
    tpu.vector_store %arg9[%c9, %c0_8], %10 {strides = array<i32>} : memref<27x128xf32, #tpu.memory_space<vmem>>, vector<3x128xf32>,
    %c12 = arith.constant 12 : index
    %c0_9 = arith.constant 0 : index
    %17 = vector.load %arg9[%c12, %c0_9] : memref<27x128xf32, #tpu.memory_space<vmem>>, vector<3x128xf32>
    tpu.vector_store %arg9[%c12, %c0_9], %15 {strides = array<i32>} : memref<27x128xf32, #tpu.memory_space<vmem>>, vector<3x128xf32>,
    %cst_10 = arith.constant 2.000000e+00 : f32
    %18 = vector.broadcast %cst_10 : f32 to vector<3x128xf32>
    %19 = arith.mulf %18, %10 : vector<3x128xf32>
    %20 = arith.mulf %19, %15 : vector<3x128xf32>
    %21 = arith.mulf %10, %10 : vector<3x128xf32>
    %cst_11 = arith.constant 2.000000e+00 : f32
    %22 = vector.broadcast %cst_11 : f32 to vector<3x128xf32>
    %23 = arith.mulf %22, %21 : vector<3x128xf32>
    %cst_12 = arith.constant 1.000000e+00 : f32
    %24 = vector.broadcast %cst_12 : f32 to vector<3x128xf32>
    %25 = arith.subf %24, %23 : vector<3x128xf32>
    %c15 = arith.constant 15 : index
    %c0_13 = arith.constant 0 : index
    %26 = vector.load %arg9[%c15, %c0_13] : memref<27x128xf32, #tpu.memory_space<vmem>>, vector<3x128xf32>
    tpu.vector_store %arg9[%c15, %c0_13], %20 {strides = array<i32>} : memref<27x128xf32, #tpu.memory_space<vmem>>, vector<3x128xf32>,
    %c18 = arith.constant 18 : index
    %c0_14 = arith.constant 0 : index
    %27 = vector.load %arg9[%c18, %c0_14] : memref<27x128xf32, #tpu.memory_space<vmem>>, vector<3x128xf32>
    tpu.vector_store %arg9[%c18, %c0_14], %25 {strides = array<i32>} : memref<27x128xf32, #tpu.memory_space<vmem>>, vector<3x128xf32>,
    %cst_15 = arith.constant 2.000000e+00 : f32
    %28 = vector.broadcast %cst_15 : f32 to vector<3x128xf32>
    %29 = arith.mulf %28, %20 : vector<3x128xf32>
    %30 = arith.mulf %29, %25 : vector<3x128xf32>
    %31 = arith.mulf %20, %20 : vector<3x128xf32>
    %cst_16 = arith.constant 2.000000e+00 : f32
    %32 = vector.broadcast %cst_16 : f32 to vector<3x128xf32>
    %33 = arith.mulf %32, %31 : vector<3x128xf32>
    %cst_17 = arith.constant 1.000000e+00 : f32
    %34 = vector.broadcast %cst_17 : f32 to vector<3x128xf32>
    %35 = arith.subf %34, %33 : vector<3x128xf32>
    %c21 = arith.constant 21 : index
    %c0_18 = arith.constant 0 : index
    %36 = vector.load %arg9[%c21, %c0_18] : memref<27x128xf32, #tpu.memory_space<vmem>>, vector<3x128xf32>
    tpu.vector_store %arg9[%c21, %c0_18], %30 {strides = array<i32>} : memref<27x128xf32, #tpu.memory_space<vmem>>, vector<3x128xf32>,
    %c24 = arith.constant 24 : index
    %c0_19 = arith.constant 0 : index
    %37 = vector.load %arg9[%c24, %c0_19] : memref<27x128xf32, #tpu.memory_space<vmem>>, vector<3x128xf32>
    tpu.vector_store %arg9[%c24, %c0_19], %35 {strides = array<i32>} : memref<27x128xf32, #tpu.memory_space<vmem>>, vector<3x128xf32>,
    %c0_20 = arith.constant 0 : index
    %c0_21 = arith.constant 0 : index
    %38 = vector.load %arg9[%c0_20, %c0_21] : memref<27x128xf32, #tpu.memory_space<vmem>>, vector<27x128xf32>
    %39 = arith.truncf %38 : vector<27x128xf32> to vector<27x128xbf16>
    %c0_22 = arith.constant 0 : index
    %c0_23 = arith.constant 0 : index
    %40 = vector.load %arg2[%c0_22, %c0_23] : memref<256x27xbf16, #tpu.memory_space<vmem>>, vector<256x27xbf16>
    %cst_24 = arith.constant dense<0.000000e+00> : vector<256x128xf32>
    %41 = tpu.matmul %40, %39, %cst_24 {dimension_numbers = #tpu.dot_dimension_numbers<[1], [0], [0], [1], [0, 0, 1, 1], [], []>} : vector<256x27xbf16>, vector<27x128xbf16>, vector<256x128xf32> -> vector<256x128xf32>
    %c0_25 = arith.constant 0 : index
    %c0_26 = arith.constant 0 : index
    %42 = vector.load %arg3[%c0_25, %c0_26] : memref<256x1xf32, #tpu.memory_space<vmem>>, vector<256x1xf32>
    %43 = vector.broadcast %42 : vector<256x1xf32> to vector<256x128xf32>
    %44 = arith.addf %41, %43 : vector<256x128xf32>
    %cst_27 = arith.constant 0.000000e+00 : f32
    %45 = vector.broadcast %cst_27 : f32 to vector<256x128xf32>
    %46 = arith.maximumf %44, %45 : vector<256x128xf32>
    %c0_28 = arith.constant 0 : index
    %c0_29 = arith.constant 0 : index
    %c0_30 = arith.constant 0 : index
    %47 = vector.load %arg4[%c0_28, %c0_29, %c0_30] : memref<3x256x256xbf16, #tpu.memory_space<vmem>>, vector<1x256x256xbf16>
    %48 = vector.shape_cast %47 : vector<1x256x256xbf16> to vector<256x256xbf16>
    %49 = arith.truncf %46 : vector<256x128xf32> to vector<256x128xbf16>
    %cst_31 = arith.constant dense<0.000000e+00> : vector<256x128xf32>
    %50 = tpu.matmul %48, %49, %cst_31 {dimension_numbers = #tpu.dot_dimension_numbers<[1], [0], [0], [1], [0, 0, 1, 1], [], []>} : vector<256x256xbf16>, vector<256x128xbf16>, vector<256x128xf32> -> vector<256x128xf32>
    %c0_32 = arith.constant 0 : index
    %c0_33 = arith.constant 0 : index
    %c0_34 = arith.constant 0 : index
    %51 = vector.load %arg5[%c0_32, %c0_33, %c0_34] : memref<3x256x1xf32, #tpu.memory_space<vmem>>, vector<1x256x1xf32>
    %52 = vector.shape_cast %51 : vector<1x256x1xf32> to vector<256x1xf32>
    %53 = vector.broadcast %52 : vector<256x1xf32> to vector<256x128xf32>
    %54 = arith.addf %50, %53 : vector<256x128xf32>
    %cst_35 = arith.constant 0.000000e+00 : f32
    %55 = vector.broadcast %cst_35 : f32 to vector<256x128xf32>
    %56 = arith.maximumf %54, %55 : vector<256x128xf32>
    %c1 = arith.constant 1 : index
    %c0_36 = arith.constant 0 : index
    %c0_37 = arith.constant 0 : index
    %57 = vector.load %arg4[%c1, %c0_36, %c0_37] : memref<3x256x256xbf16, #tpu.memory_space<vmem>>, vector<1x256x256xbf16>
    %58 = vector.shape_cast %57 : vector<1x256x256xbf16> to vector<256x256xbf16>
    %59 = arith.truncf %56 : vector<256x128xf32> to vector<256x128xbf16>
    %cst_38 = arith.constant dense<0.000000e+00> : vector<256x128xf32>
    %60 = tpu.matmul %58, %59, %cst_38 {dimension_numbers = #tpu.dot_dimension_numbers<[1], [0], [0], [1], [0, 0, 1, 1], [], []>} : vector<256x256xbf16>, vector<256x128xbf16>, vector<256x128xf32> -> vector<256x128xf32>
    %c1_39 = arith.constant 1 : index
    %c0_40 = arith.constant 0 : index
    %c0_41 = arith.constant 0 : index
    %61 = vector.load %arg5[%c1_39, %c0_40, %c0_41] : memref<3x256x1xf32, #tpu.memory_space<vmem>>, vector<1x256x1xf32>
    %62 = vector.shape_cast %61 : vector<1x256x1xf32> to vector<256x1xf32>
    %63 = vector.broadcast %62 : vector<256x1xf32> to vector<256x128xf32>
    %64 = arith.addf %60, %63 : vector<256x128xf32>
    %cst_42 = arith.constant 0.000000e+00 : f32
    %65 = vector.broadcast %cst_42 : f32 to vector<256x128xf32>
    %66 = arith.maximumf %64, %65 : vector<256x128xf32>
    %c2 = arith.constant 2 : index
    %c0_43 = arith.constant 0 : index
    %c0_44 = arith.constant 0 : index
    %67 = vector.load %arg4[%c2, %c0_43, %c0_44] : memref<3x256x256xbf16, #tpu.memory_space<vmem>>, vector<1x256x256xbf16>
    %68 = vector.shape_cast %67 : vector<1x256x256xbf16> to vector<256x256xbf16>
    %69 = arith.truncf %66 : vector<256x128xf32> to vector<256x128xbf16>
    %cst_45 = arith.constant dense<0.000000e+00> : vector<256x128xf32>
    %70 = tpu.matmul %68, %69, %cst_45 {dimension_numbers = #tpu.dot_dimension_numbers<[1], [0], [0], [1], [0, 0, 1, 1], [], []>} : vector<256x256xbf16>, vector<256x128xbf16>, vector<256x128xf32> -> vector<256x128xf32>
    %c2_46 = arith.constant 2 : index
    %c0_47 = arith.constant 0 : index
    %c0_48 = arith.constant 0 : index
    %71 = vector.load %arg5[%c2_46, %c0_47, %c0_48] : memref<3x256x1xf32, #tpu.memory_space<vmem>>, vector<1x256x1xf32>
    %72 = vector.shape_cast %71 : vector<1x256x1xf32> to vector<256x1xf32>
    %73 = vector.broadcast %72 : vector<256x1xf32> to vector<256x128xf32>
    %74 = arith.addf %70, %73 : vector<256x128xf32>
    %cst_49 = arith.constant 0.000000e+00 : f32
    %75 = vector.broadcast %cst_49 : f32 to vector<256x128xf32>
    %76 = arith.maximumf %74, %75 : vector<256x128xf32>
    %c0_50 = arith.constant 0 : index
    %c0_51 = arith.constant 0 : index
    %77 = vector.load %arg6[%c0_50, %c0_51] : memref<1x256xbf16, #tpu.memory_space<vmem>>, vector<1x256xbf16>
    %78 = arith.truncf %76 : vector<256x128xf32> to vector<256x128xbf16>
    %cst_52 = arith.constant dense<0.000000e+00> : vector<1x128xf32>
    %79 = tpu.matmul %77, %78, %cst_52 {dimension_numbers = #tpu.dot_dimension_numbers<[1], [0], [0], [1], [0, 0, 1, 1], [], []>} : vector<1x256xbf16>, vector<256x128xbf16>, vector<1x128xf32> -> vector<1x128xf32>
    %c0_53 = arith.constant 0 : index
    %c0_54 = arith.constant 0 : index
    %80 = vector.load %arg7[%c0_53, %c0_54] : memref<1x1xf32, #tpu.memory_space<vmem>>, vector<1x1xf32>
    %81 = vector.broadcast %80 : vector<1x1xf32> to vector<1x128xf32>
    %82 = arith.addf %79, %81 : vector<1x128xf32>
    %c0_55 = arith.constant 0 : index
    %c0_56 = arith.constant 0 : index
    %83 = vector.load %arg8[%c0_55, %c0_56] : memref<1x128xf32, #tpu.memory_space<vmem>>, vector<1x128xf32>
    tpu.vector_store %arg8[%c0_55, %c0_56], %82 {strides = array<i32>} : memref<1x128xf32, #tpu.memory_space<vmem>>, vector<1x128xf32>,
    return
  }
  func.func @transform_0(%arg0: i32) -> (i32, i32) {
    %c0_i32 = arith.constant 0 : i32
    %c0_i32_0 = arith.constant 0 : i32
    return %c0_i32, %arg0 : i32, i32
  }
  func.func @transform_1(%arg0: i32) -> (i32, i32) {
    %c0_i32 = arith.constant 0 : i32
    %c0_i32_0 = arith.constant 0 : i32
    %c0_i32_1 = arith.constant 0 : i32
    return %c0_i32, %c0_i32_0 : i32, i32
  }
  func.func @transform_2(%arg0: i32) -> (i32, i32) {
    %c0_i32 = arith.constant 0 : i32
    %c0_i32_0 = arith.constant 0 : i32
    %c0_i32_1 = arith.constant 0 : i32
    return %c0_i32, %c0_i32_0 : i32, i32
  }
  func.func @transform_3(%arg0: i32) -> (i32, i32, i32) {
    %c0_i32 = arith.constant 0 : i32
    %c0_i32_0 = arith.constant 0 : i32
    %c0_i32_1 = arith.constant 0 : i32
    %c0_i32_2 = arith.constant 0 : i32
    return %c0_i32, %c0_i32_0, %c0_i32_1 : i32, i32, i32
  }
  func.func @transform_4(%arg0: i32) -> (i32, i32, i32) {
    %c0_i32 = arith.constant 0 : i32
    %c0_i32_0 = arith.constant 0 : i32
    %c0_i32_1 = arith.constant 0 : i32
    %c0_i32_2 = arith.constant 0 : i32
    return %c0_i32, %c0_i32_0, %c0_i32_1 : i32, i32, i32
  }
  func.func @transform_5(%arg0: i32) -> (i32, i32) {
    %c0_i32 = arith.constant 0 : i32
    %c0_i32_0 = arith.constant 0 : i32
    %c0_i32_1 = arith.constant 0 : i32
    return %c0_i32, %c0_i32_0 : i32, i32
  }
  func.func @transform_6(%arg0: i32) -> (i32, i32) {
    %c0_i32 = arith.constant 0 : i32
    %c0_i32_0 = arith.constant 0 : i32
    %c0_i32_1 = arith.constant 0 : i32
    return %c0_i32, %c0_i32_0 : i32, i32
  }
  func.func @transform_7(%arg0: i32) -> (i32, i32) {
    %c0_i32 = arith.constant 0 : i32
    %c0_i32_0 = arith.constant 0 : i32
    return %c0_i32, %arg0 : i32, i32
  }
}

</mosaic_0001>

<llo_original>
// kernel: tpu_custom_call.1
$region0: #{tpu_custom_call.1}
  #allocation0 [shape = 'u32[]', space=smem, size = 0x4, offset = 0x4, fixed_abs, tag = 'smem constant byte address 0x4 - core index']
  #allocation1 [shape = 'u32[144,128]{1,0:T(1,128)}', space=vmem, size = 0x12000, scoped, tag = 'internal scratch']
  #allocation2 [shape = 'f32[27,128]{1,0:T(8,128)}', space=vmem, size = 0x4000, scoped, tag = 'scratch operand']
  #allocation3 [shape = 'f32[1,1]{1,0:T(1,128)S(1)}', space=vmem, size = 0x200, scoped, tag = 'scoped memory for tpu_custom_call.1']
  %s0 = inlined_call_operand.vmem [shape: f32[3,256], index: 0, kind: input, shape index: {}]
  %s1 = inlined_call_operand.vmem [shape: bf16[256,27], index: 1, kind: input, shape index: {}]
  %s2 = inlined_call_operand.vmem [shape: f32[256,1], index: 2, kind: input, shape index: {}]
  %s3 = inlined_call_operand.vmem [shape: bf16[3,256,256], index: 3, kind: input, shape index: {}]
  %s4 = inlined_call_operand.vmem [shape: f32[3,256,1], index: 4, kind: input, shape index: {}]
  %s5 = inlined_call_operand.vmem [shape: bf16[1,256], index: 5, kind: input, shape index: {}]
  %s6 = inlined_call_operand.<no memory space> [shape: f32[1,1], index: 6, kind: input, shape index: {}]
  %s7 = inlined_call_operand.hbm [shape: f32[1,256], index: 7, kind: output, shape index: {}]
  %s8 = sld [smem:[#allocation0]]
  $region61: #{tpu_custom_call.1} parent=0
    _
  %s10 = ssub.s32 1, %s8
  %s11 = scalar_select 0, %s10, %s8
  %v12 = vstv %s6
  %13 = vst [vmem:[#allocation3] sm:$0x1] %v12
  $region1: #{tpu_custom_call.1} parent=0
    #allocation4 [shape = 'u8[1024]{0}', space=vmem, size = 0x400, scoped, tag = 'output window, operand 0']
    #allocation5 [shape = 's32[2]{0}', space=sflag, size = 0x8, scoped, tag = 'scoped memory for tpu_custom_call.1']
    %14 = vsyncpa [#allocation5], 0
    %s15 = scalar_lea.sflag [#allocation5], 1
    %16 = vsyncpa %s15, 0
    loop: start=0, step=1, limit=4
    $region2: #{tpu_custom_call.1} parent=1 // loop_pre_header
      _
    $region3: #{tpu_custom_call.1} parent=1 // loop_header
      %s18 = sphi 0, %s22
      %p19 = scmp.ge.s32.totalorder %s18, 4
      %s28 = sphi 0, %s30
      %s31 = sphi 0, %s28
      %s32 = sphi 0, %s31
      %s48 = sphi 0, %s32
      %s52 = sphi 0, %s52
      %s54 = sphi 0, %s52
      %s55 = sphi 0, %s54
      %s69 = sphi 0, %s55
      %s73 = sphi 0, %s73
      %s75 = sphi 0, %s73
      %s76 = sphi 0, %s75
      %s90 = sphi 0, %s76
      %s94 = sphi 0, %s94
      %s96 = sphi 0, %s94
      %s97 = sphi 0, %s96
      %s111 = sphi 0, %s97
      %s115 = sphi 0, %s115
      %s117 = sphi 0, %s115
      %s118 = sphi 0, %s117
      %s132 = sphi 0, %s118
      %s136 = sphi 0, %s136
      %s138 = sphi 0, %s136
      %s139 = sphi 0, %s138
      %s153 = sphi 0, %s139
      %s157 = sphi 0, %s157
      %s159 = sphi 0, %s157
      %s160 = sphi 0, %s159
      %s174 = sphi 0, %s160
      %s180 = sphi 0, %s182
      %s183 = sphi 0, %s180
      %s184 = sphi 0, %s183
      %s200 = sphi 0, %s184
    $region4: #{tpu_custom_call.1} parent=1 // loop_header_branch
      %21 = sbr.rel (%p19) target = $region8
    $region5: #{tpu_custom_call.1} parent=1 // loop_body
      %s23 = ssub.s32 %s18, 1
      %s24 = ssub.s32 %s18, 2
      %s25 = sadd.s32 %s18, 1
      %s26 = ssub.s32 %s18, %s25
      %p27 = scmp.eq.s32.totalorder %s26, 0
      %s29 = sadd.s32 %s28, 1
      %s30 = scalar_select %p27, %s28, %s29
      %p33 = pneg %p27
      %p34 = scmp.eq.s32.totalorder %s18, 1
      %p35 = por %p33, %p34
      %p36 = scmp.ne.s32.totalorder %s28, %s31
      %p37 = scmp.eq.s32.totalorder %s18, 0
      %p38 = por %p36, %p37
      %p39 = scmp.ne.s32.totalorder %s28, %s31
      %p40 = scmp.eq.s32.totalorder %s23, 1
      %p41 = por %p39, %p40
      %p42 = scmp.ne.s32.totalorder %s31, %s32
      %p43 = scmp.eq.s32.totalorder %s23, 0
      %p44 = por %p42, %p43
      %p45 = scmp.ne.s32.totalorder %s31, %s32
      %p46 = scmp.eq.s32.totalorder %s24, 1
      %p47 = por %p45, %p46
      %p49 = scmp.ne.s32.totalorder %s32, %s48
      %p50 = scmp.eq.s32.totalorder %s24, 0
      %p51 = por %p49, %p50
      %s53 = sadd.s32 %s52, 1
      %p56 = scmp.eq.s32.totalorder %s18, 1
      %p57 = scmp.ne.s32.totalorder %s52, %s54
      %p58 = scmp.eq.s32.totalorder %s18, 0
      %p59 = por %p57, %p58
      %p60 = scmp.ne.s32.totalorder %s52, %s54
      %p61 = scmp.eq.s32.totalorder %s23, 1
      %p62 = por %p60, %p61
      %p63 = scmp.ne.s32.totalorder %s54, %s55
      %p64 = scmp.eq.s32.totalorder %s23, 0
      %p65 = por %p63, %p64
      %p66 = scmp.ne.s32.totalorder %s54, %s55
      %p67 = scmp.eq.s32.totalorder %s24, 1
      %p68 = por %p66, %p67
      %p70 = scmp.ne.s32.totalorder %s55, %s69
      %p71 = scmp.eq.s32.totalorder %s24, 0
      %p72 = por %p70, %p71
      %s74 = sadd.s32 %s73, 1
      %p77 = scmp.eq.s32.totalorder %s18, 1
      %p78 = scmp.ne.s32.totalorder %s73, %s75
      %p79 = scmp.eq.s32.totalorder %s18, 0
      %p80 = por %p78, %p79
      %p81 = scmp.ne.s32.totalorder %s73, %s75
      %p82 = scmp.eq.s32.totalorder %s23, 1
      %p83 = por %p81, %p82
      %p84 = scmp.ne.s32.totalorder %s75, %s76
      %p85 = scmp.eq.s32.totalorder %s23, 0
      %p86 = por %p84, %p85
      %p87 = scmp.ne.s32.totalorder %s75, %s76
      %p88 = scmp.eq.s32.totalorder %s24, 1
      %p89 = por %p87, %p88
      %p91 = scmp.ne.s32.totalorder %s76, %s90
      %p92 = scmp.eq.s32.totalorder %s24, 0
      %p93 = por %p91, %p92
      %s95 = sadd.s32 %s94, 1
      %p98 = scmp.eq.s32.totalorder %s18, 1
      %p99 = scmp.ne.s32.totalorder %s94, %s96
      %p100 = scmp.eq.s32.totalorder %s18, 0
      %p101 = por %p99, %p100
      %p102 = scmp.ne.s32.totalorder %s94, %s96
      %p103 = scmp.eq.s32.totalorder %s23, 1
      %p104 = por %p102, %p103
      %p105 = scmp.ne.s32.totalorder %s96, %s97
      %p106 = scmp.eq.s32.totalorder %s23, 0
      %p107 = por %p105, %p106
      %p108 = scmp.ne.s32.totalorder %s96, %s97
      %p109 = scmp.eq.s32.totalorder %s24, 1
      %p110 = por %p108, %p109
      %p112 = scmp.ne.s32.totalorder %s97, %s111
      %p113 = scmp.eq.s32.totalorder %s24, 0
      %p114 = por %p112, %p113
      %s116 = sadd.s32 %s115, 1
      %p119 = scmp.eq.s32.totalorder %s18, 1
      %p120 = scmp.ne.s32.totalorder %s115, %s117
      %p121 = scmp.eq.s32.totalorder %s18, 0
      %p122 = por %p120, %p121
      %p123 = scmp.ne.s32.totalorder %s115, %s117
      %p124 = scmp.eq.s32.totalorder %s23, 1
      %p125 = por %p123, %p124
      %p126 = scmp.ne.s32.totalorder %s117, %s118
      %p127 = scmp.eq.s32.totalorder %s23, 0
      %p128 = por %p126, %p127
      %p129 = scmp.ne.s32.totalorder %s117, %s118
      %p130 = scmp.eq.s32.totalorder %s24, 1
      %p131 = por %p129, %p130
      %p133 = scmp.ne.s32.totalorder %s118, %s132
      %p134 = scmp.eq.s32.totalorder %s24, 0
      %p135 = por %p133, %p134
      %s137 = sadd.s32 %s136, 1
      %p140 = scmp.eq.s32.totalorder %s18, 1
      %p141 = scmp.ne.s32.totalorder %s136, %s138
      %p142 = scmp.eq.s32.totalorder %s18, 0
      %p143 = por %p141, %p142
      %p144 = scmp.ne.s32.totalorder %s136, %s138
      %p145 = scmp.eq.s32.totalorder %s23, 1
      %p146 = por %p144, %p145
      %p147 = scmp.ne.s32.totalorder %s138, %s139
      %p148 = scmp.eq.s32.totalorder %s23, 0
      %p149 = por %p147, %p148
      %p150 = scmp.ne.s32.totalorder %s138, %s139
      %p151 = scmp.eq.s32.totalorder %s24, 1
      %p152 = por %p150, %p151
      %p154 = scmp.ne.s32.totalorder %s139, %s153
      %p155 = scmp.eq.s32.totalorder %s24, 0
      %p156 = por %p154, %p155
      %s158 = sadd.s32 %s157, 1
      %p161 = scmp.eq.s32.totalorder %s18, 1
      %p162 = scmp.ne.s32.totalorder %s157, %s159
      %p163 = scmp.eq.s32.totalorder %s18, 0
      %p164 = por %p162, %p163
      %p165 = scmp.ne.s32.totalorder %s157, %s159
      %p166 = scmp.eq.s32.totalorder %s23, 1
      %p167 = por %p165, %p166
      %p168 = scmp.ne.s32.totalorder %s159, %s160
      %p169 = scmp.eq.s32.totalorder %s23, 0
      %p170 = por %p168, %p169
      %p171 = scmp.ne.s32.totalorder %s159, %s160
      %p172 = scmp.eq.s32.totalorder %s24, 1
      %p173 = por %p171, %p172
      %p175 = scmp.ne.s32.totalorder %s160, %s174
      %p176 = scmp.eq.s32.totalorder %s24, 0
      %p177 = por %p175, %p176
      %s178 = ssub.s32 %s18, %s25
      %p179 = scmp.eq.s32.totalorder %s178, 0
      %s181 = sadd.s32 %s180, 1
      %s182 = scalar_select %p179, %s180, %s181
      %p185 = pneg %p179
      %p186 = scmp.eq.s32.totalorder %s18, 1
      %p187 = por %p185, %p186
      %p188 = scmp.ne.s32.totalorder %s180, %s183
      %p189 = scmp.eq.s32.totalorder %s18, 0
      %p190 = por %p188, %p189
      %p191 = scmp.ne.s32.totalorder %s180, %s183
      %p192 = scmp.eq.s32.totalorder %s23, 1
      %p193 = por %p191, %p192
      %p194 = scmp.ne.s32.totalorder %s183, %s184
      %p195 = scmp.eq.s32.totalorder %s23, 0
      %p196 = por %p194, %p195
      %p197 = scmp.ne.s32.totalorder %s183, %s184
      %p198 = scmp.eq.s32.totalorder %s24, 1
      %p199 = por %p197, %p198
      %p201 = scmp.ne.s32.totalorder %s184, %s200
      %p202 = scmp.eq.s32.totalorder %s24, 0
      %p203 = por %p201, %p202
      %p204 = scmp.le.s32.totalorder 1, %s18
      %p205 = scmp.lt.s32.totalorder %s18, 3
      %p206 = pnand %p204, %p205
      %p207 = pneg %p206
      // Predicated region
      $region9: #{tpu_custom_call.1} parent=5 // pred_check
        _
      $region10: #{tpu_custom_call.1} parent=5 // pred_check_branch
        %209 = sbr.rel (%p206) target = $region12
      $region11: #{tpu_custom_call.1} parent=5 // pred_region
        %s210 = ssub.s32 %s18, 1
        // Predicated region
        $region13: #{tpu_custom_call.1} parent=11 // pred_check
          %p211 = pneg %p65
        $region14: #{tpu_custom_call.1} parent=11 // pred_check_branch
          %213 = sbr.rel (%p211) target = $region16
        $region15: #{tpu_custom_call.1} parent=11 // pred_region
          _
        $region16: #{tpu_custom_call.1} parent=11 // pred_fallthru
          _
        // Predicated region
        $region17: #{tpu_custom_call.1} parent=11 // pred_check
          %p214 = pneg %p86
        $region18: #{tpu_custom_call.1} parent=11 // pred_check_branch
          %216 = sbr.rel (%p214) target = $region20
        $region19: #{tpu_custom_call.1} parent=11 // pred_region
          _
        $region20: #{tpu_custom_call.1} parent=11 // pred_fallthru
          _
        // Predicated region
        $region21: #{tpu_custom_call.1} parent=11 // pred_check
          %p217 = pneg %p107
        $region22: #{tpu_custom_call.1} parent=11 // pred_check_branch
          %219 = sbr.rel (%p217) target = $region24
        $region23: #{tpu_custom_call.1} parent=11 // pred_region
          _
        $region24: #{tpu_custom_call.1} parent=11 // pred_fallthru
          _
        // Predicated region
        $region25: #{tpu_custom_call.1} parent=11 // pred_check
          %p220 = pneg %p128
        $region26: #{tpu_custom_call.1} parent=11 // pred_check_branch
          %222 = sbr.rel (%p220) target = $region28
        $region27: #{tpu_custom_call.1} parent=11 // pred_region
          _
        $region28: #{tpu_custom_call.1} parent=11 // pred_fallthru
          _
        // Predicated region
        $region29: #{tpu_custom_call.1} parent=11 // pred_check
          %p223 = pneg %p149
        $region30: #{tpu_custom_call.1} parent=11 // pred_check_branch
          %225 = sbr.rel (%p223) target = $region32
        $region31: #{tpu_custom_call.1} parent=11 // pred_region
          _
        $region32: #{tpu_custom_call.1} parent=11 // pred_fallthru
          _
        // Predicated region
        $region33: #{tpu_custom_call.1} parent=11 // pred_check
          %p226 = pneg %p170
        $region34: #{tpu_custom_call.1} parent=11 // pred_check_branch
          %228 = sbr.rel (%p226) target = $region36
        $region35: #{tpu_custom_call.1} parent=11 // pred_region
          _
        $region36: #{tpu_custom_call.1} parent=11 // pred_fallthru
          _
      $region12: #{tpu_custom_call.1} parent=5 // pred_fallthru
        _
      %p229 = scmp.lt.s32.totalorder %s18, 2
      // Predicated region
      $region37: #{tpu_custom_call.1} parent=5 // pred_check
        %p230 = pneg %p229
      $region38: #{tpu_custom_call.1} parent=5 // pred_check_branch
        %232 = sbr.rel (%p230) target = $region40
      $region39: #{tpu_custom_call.1} parent=5 // pred_region
        // Predicated region
        $region41: #{tpu_custom_call.1} parent=39 // pred_check
          %p233 = pneg %p38
        $region42: #{tpu_custom_call.1} parent=39 // pred_check_branch
          %235 = sbr.rel (%p233) target = $region44
        $region43: #{tpu_custom_call.1} parent=39 // pred_region
          %p236 = scmp.lt.s32.totalorder %s18, 1
          %s237 = scalar_select %p236, %s18, 1
          %s238 = smul.addr %s237, 4
          %s239 = scalar_lea.vmem %s0, %s238
        $region44: #{tpu_custom_call.1} parent=39 // pred_fallthru
          _
      $region40: #{tpu_custom_call.1} parent=5 // pred_fallthru
        _
      %p240 = scmp.le.s32.totalorder 1, %s18
      %p241 = scmp.lt.s32.totalorder %s18, 3
      %p242 = pnand %p240, %p241
      %p243 = pneg %p242
      // Predicated region
      $region45: #{tpu_custom_call.1} parent=5 // pred_check
        _
      $region46: #{tpu_custom_call.1} parent=5 // pred_check_branch
        %245 = sbr.rel (%p242) target = $region48
      $region47: #{tpu_custom_call.1} parent=5 // pred_region
        %s246 = ssub.s32 %s18, 1
        %p247 = scmp.lt.s32.totalorder %s23, 1
        %s248 = scalar_select %p247, %s23, 1
        %s249 = smul.addr %s248, 4
        %s250 = scalar_lea.vmem %s0, %s249
        %p251 = pneg %p44
        %p252 = pneg %p41
        %p253 = pneg %p65
        %p254 = pneg %p62
        %p255 = pneg %p86
        %p256 = pneg %p83
        %p257 = pneg %p107
        %p258 = pneg %p104
        %p259 = pneg %p128
        %p260 = pneg %p125
        %p261 = pneg %p149
        %p262 = pneg %p146
        %p263 = pneg %p170
        %p264 = pneg %p167
        %p265 = pneg %p196
        %p266 = pneg %p193
        %s267 = sand.u32 %s183, 1
        %s268 = scalar_lea.sflag [#allocation5], %s267
        %s269 = sand.u32 %s183, 1
        %s270 = scalar_lea.vmem [#allocation4], %s269
        %p271 = scmp.lt.s32.totalorder %s23, 1
        %s272 = scalar_select %p271, %s23, 1
        %s273 = smul.addr %s272, 4
        %s274 = scalar_lea.vmem %s0, %s273
        %v276 = vld [vmem:[%s274] sm:$0x7]
        %277 = vst [vmem:[#allocation2] sm:$0x7] %v276
        %v278 = vmul.f32 %v276, 3.1415927
        %v279 = vand.u32 2147483647, %v278
        %vm280 = vcmp.le.f32.partialorder %v279, 0.7853982
        %vm281 = vcmp.lt.s32.totalorder %v278, 0
        %v282 = vand.u32 %v278, 2139095040
        %v283 = vshrl.u32 %v282, 23
        %v284 = vsub.s32 %v283, 127
        %v285 = vand.u32 2147483647, %v278
        %v286 = vand.u32 %v285, 8388607
        %v287 = vor.u32 %v286, 8388608
        %v288 = vsub.s32 0, %v287
        %v289 = vadd.s32 %v284, 1
        %vm290 = vcmp.gt.s32.totalorder %v289, 0
        %v291 = vsel %vm290, %v289, 0
        %v292 = vshrl.u32 %v291, 5
        %v293 = vand.u32 %v291, 31
        %v294 = vsub.s32 32, %v293
        %v295 = vshrl.u32 683565275, %v294
        %v296 = vshll.u32 683565275, %v293
        %v297 = vshrl.u32 2475754826, %v294
        %v298 = vor.u32 %v296, %v297
        %v299 = vshll.u32 2475754826, %v293
        %v300 = vshrl.u32 2131351028, %v294
        %v301 = vor.u32 %v299, %v300
        %v302 = vshll.u32 2131351028, %v293
        %v303 = vshrl.u32 2102212464, %v294
        %v304 = vor.u32 %v302, %v303
        %v305 = vshll.u32 2102212464, %v293
        %v306 = vshrl.u32 920167782, %v294
        %v307 = vor.u32 %v305, %v306
        %v308 = vshll.u32 920167782, %v293
        %v309 = vshrl.u32 1326507024, %v294
        %v310 = vor.u32 %v308, %v309
        %vm311 = vcmp.lt.s32.totalorder %v292, 1
        %vm312 = vcmp.lt.s32.totalorder %v292, 2
        %vm313 = vcmp.lt.s32.totalorder %v292, 3
        %vm314 = vcmp.lt.s32.totalorder %v292, 4
        %v315 = vsel %vm311, %v295, %v298
        %v316 = vsel %vm314, %v304, 2102212464
        %v317 = vsel %vm313, %v301, %v316
        %v318 = vsel %vm312, %v315, %v317
        %v319 = vsel %vm311, %v298, %v301
        %v320 = vsel %vm314, %v307, 920167782
        %v321 = vsel %vm313, %v304, %v320
        %v322 = vsel %vm312, %v319, %v321
        %v323 = vsel %vm311, %v301, %v304
        %v324 = vsel %vm314, %v310, 1326507024
        %v325 = vsel %vm313, %v307, %v324
        %v326 = vsel %vm312, %v323, %v325
        %v327 = vshll.u32 %v287, 8
        %v328 = vmul.u32.u64.compose %v327, %v326
        %v329 = vextract.low.u32 %v328
        %v330 = vextract.high.u32 %v328
        %v331 = vmul.u32.u64.compose %v327, %v322
        %v332 = vextract.low.u32 %v331
        %v333 = vextract.high.u32 %v331
        %v334 = vmul.u32 %v327, %v318
        %v335 = vadd.s32 %v330, %v332
        %vm336 = vc.u32 %v330, %v332
        %v337 = vadd.s32 %v333, 1
        %v338 = vsel %vm336, %v337, %v333
        %v339 = vadd.s32 %v334, %v338
        %v340 = vadd.s32 %v339, 536870912
        %v341 = vshrl.u32 %v340, 30
        %v342 = vshll.u32 %v341, 30
        %v343 = vsub.s32 %v339, %v342
        %vm344 = vcmp.lt.s32.totalorder %v343, 0
        %v345 = vsub.s32 0, %v343
        %v346 = vsel %vm344, %v345, %v343
        %v347 = vclz %v346
        %v348 = vsub.s32 %v347, 2
        %vm349 = vcmp.gt.s32.totalorder 0, %v348
        %v350 = vsel %vm349, 0, %v348
        %v351 = vsub.s32 32, %v350
        %v352 = vshll.u32 %v343, %v350
        %v353 = vshrl.u32 %v335, %v351
        %v354 = vor.u32 %v352, %v353
        %v355 = vsub.s32 4294967266, %v350
        %v356 = vadd.s32 %v355, 127
        %v357 = vshll.u32 %v356, 23
        %v358 = vor.u32 4788187, %v357
        %v359 = vand.u32 2147483647, %v358
        %v361 = vcvt.s32.f32 %v354
        %v362 = vmul.f32 %v361, %v359
        %v363 = vxor.u32 %v362, 2147483648
        %v364 = vsel %vm281, %v363, %v362
        %v365 = vsub.s32 4, %v341
        %v366 = vsel %vm281, %v365, %v341
        %v367 = vsel %vm280, %v278, %v364
        %v368 = vsel %vm280, 0, %v366
        %v369 = vcosq.f32.pop %v367
        %v370 = vsinq.f32.pop %v367
        %vm371 = vweird.f32 %v278
        %v372 = vadd.s32 %v368, 3
        %v373 = vand.u32 %v372, 3
        %vm374 = vcmp.lt.s32.totalorder %v373, 2
        %vm375 = vcmp.eq.s32.totalorder %v373, 0
        %v376 = vxor.u32 %v370, 2147483648
        %v377 = vsel %vm375, %v369, %v376
        %vm378 = vcmp.eq.s32.totalorder %v373, 2
        %v379 = vxor.u32 %v369, 2147483648
        %v380 = vsel %vm378, %v379, %v370
        %v381 = vsel %vm374, %v377, %v380
        %v382 = vsel %vm371, nan, %v381
        %v383 = vand.u32 2147483647, %v278
        %vm384 = vcmp.le.f32.partialorder %v383, 0.7853982
        %vm385 = vcmp.lt.s32.totalorder %v278, 0
        %v386 = vand.u32 %v278, 2139095040
        %v387 = vshrl.u32 %v386, 23
        %v388 = vsub.s32 %v387, 127
        %v389 = vand.u32 2147483647, %v278
        %v390 = vand.u32 %v389, 8388607
        %v391 = vor.u32 %v390, 8388608
        %v392 = vsub.s32 0, %v391
        %v393 = vadd.s32 %v388, 1
        %vm394 = vcmp.gt.s32.totalorder %v393, 0
        %v395 = vsel %vm394, %v393, 0
        %v396 = vshrl.u32 %v395, 5
        %v397 = vand.u32 %v395, 31
        %v398 = vsub.s32 32, %v397
        %v399 = vshrl.u32 683565275, %v398
        %v400 = vshll.u32 683565275, %v397
        %v401 = vshrl.u32 2475754826, %v398
        %v402 = vor.u32 %v400, %v401
        %v403 = vshll.u32 2475754826, %v397
        %v404 = vshrl.u32 2131351028, %v398
        %v405 = vor.u32 %v403, %v404
        %v406 = vshll.u32 2131351028, %v397
        %v407 = vshrl.u32 2102212464, %v398
        %v408 = vor.u32 %v406, %v407
        %v409 = vshll.u32 2102212464, %v397
        %v410 = vshrl.u32 920167782, %v398
        %v411 = vor.u32 %v409, %v410
        %v412 = vshll.u32 920167782, %v397
        %v413 = vshrl.u32 1326507024, %v398
        %v414 = vor.u32 %v412, %v413
        %vm415 = vcmp.lt.s32.totalorder %v396, 1
        %vm416 = vcmp.lt.s32.totalorder %v396, 2
        %vm417 = vcmp.lt.s32.totalorder %v396, 3
        %vm418 = vcmp.lt.s32.totalorder %v396, 4
        %v419 = vsel %vm415, %v399, %v402
        %v420 = vsel %vm418, %v408, 2102212464
        %v421 = vsel %vm417, %v405, %v420
        %v422 = vsel %vm416, %v419, %v421
        %v423 = vsel %vm415, %v402, %v405
        %v424 = vsel %vm418, %v411, 920167782
        %v425 = vsel %vm417, %v408, %v424
        %v426 = vsel %vm416, %v423, %v425
        %v427 = vsel %vm415, %v405, %v408
        %v428 = vsel %vm418, %v414, 1326507024
        %v429 = vsel %vm417, %v411, %v428
        %v430 = vsel %vm416, %v427, %v429
        %v431 = vshll.u32 %v391, 8
        %v432 = vmul.u32.u64.compose %v431, %v430
        %v433 = vextract.low.u32 %v432
        %v434 = vextract.high.u32 %v432
        %v435 = vmul.u32.u64.compose %v431, %v426
        %v436 = vextract.low.u32 %v435
        %v437 = vextract.high.u32 %v435
        %v438 = vmul.u32 %v431, %v422
        %v439 = vadd.s32 %v434, %v436
        %vm440 = vc.u32 %v434, %v436
        %v441 = vadd.s32 %v437, 1
        %v442 = vsel %vm440, %v441, %v437
        %v443 = vadd.s32 %v438, %v442
        %v444 = vadd.s32 %v443, 536870912
        %v445 = vshrl.u32 %v444, 30
        %v446 = vshll.u32 %v445, 30
        %v447 = vsub.s32 %v443, %v446
        %vm448 = vcmp.lt.s32.totalorder %v447, 0
        %v449 = vsub.s32 0, %v447
        %v450 = vsel %vm448, %v449, %v447
        %v451 = vclz %v450
        %v452 = vsub.s32 %v451, 2
        %vm453 = vcmp.gt.s32.totalorder 0, %v452
        %v454 = vsel %vm453, 0, %v452
        %v455 = vsub.s32 32, %v454
        %v456 = vshll.u32 %v447, %v454
        %v457 = vshrl.u32 %v439, %v455
        %v458 = vor.u32 %v456, %v457
        %v459 = vsub.s32 4294967266, %v454
        %v460 = vadd.s32 %v459, 127
        %v461 = vshll.u32 %v460, 23
        %v462 = vor.u32 4788187, %v461
        %v463 = vand.u32 2147483647, %v462
        %v465 = vcvt.s32.f32 %v458
        %v466 = vmul.f32 %v465, %v463
        %v467 = vxor.u32 %v466, 2147483648
        %v468 = vsel %vm385, %v467, %v466
        %v469 = vsub.s32 4, %v445
        %v470 = vsel %vm385, %v469, %v445
        %v471 = vsel %vm384, %v278, %v468
        %v472 = vsel %vm384, 0, %v470
        %v473 = vcosq.f32.pop %v471
        %v474 = vsinq.f32.pop %v471
        %vm475 = vweird.f32 %v278
        %v476 = vand.u32 %v472, 3
        %vm477 = vcmp.lt.s32.totalorder %v476, 2
        %vm478 = vcmp.eq.s32.totalorder %v476, 0
        %v479 = vxor.u32 %v474, 2147483648
        %v480 = vsel %vm478, %v473, %v479
        %vm481 = vcmp.eq.s32.totalorder %v476, 2
        %v482 = vxor.u32 %v473, 2147483648
        %v483 = vsel %vm481, %v482, %v474
        %v484 = vsel %vm477, %v480, %v483
        %v485 = vsel %vm475, nan, %v484
        %486 = vst [vmem:[#allocation2 + $0x3] sm:$0x7] %v382
        %487 = vst [vmem:[#allocation2 + $0x6] sm:$0x7] %v485
        %v488 = vmul.f32 %v382, 2.0
        %v489 = vmul.f32 %v488, %v485
        %v490 = vmul.f32 %v382, %v382
        %v491 = vmul.f32 %v490, 2.0
        %v492 = vsub.f32 1.0, %v491
        %493 = vst [vmem:[#allocation2 + $0x9] sm:$0x7] %v489
        %494 = vst [vmem:[#allocation2 + $0xc] sm:$0x7] %v492
        %v495 = vmul.f32 %v489, 2.0
        %v496 = vmul.f32 %v495, %v492
        %v497 = vmul.f32 %v489, %v489
        %v498 = vmul.f32 %v497, 2.0
        %v499 = vsub.f32 1.0, %v498
        %500 = vst [vmem:[#allocation2 + $0xf] sm:$0x7] %v496
        %501 = vst [vmem:[#allocation2 + $0x12] sm:$0x7] %v499
        %v502 = vmul.f32 %v496, 2.0
        %v503 = vmul.f32 %v502, %v499
        %v504 = vmul.f32 %v496, %v496
        %v505 = vmul.f32 %v504, 2.0
        %v506 = vsub.f32 1.0, %v505
        %507 = vst [vmem:[#allocation2 + $0x15] sm:$0x7] %v503
        %508 = vst [vmem:[#allocation2 + $0x18] sm:$0x7] %v506
        %v509 = vld [vmem:[#allocation2] sm:$0xff]
        %v510 = vld [vmem:[#allocation2 + $0x8] sm:$0xff]
        %v511 = vld [vmem:[#allocation2 + $0x10] sm:$0xff]
        %v512 = vld [vmem:[#allocation2 + $0x18] sm:$0x7]
        %v513 = vpack.c.bf16 %v510, %v509
        %v514 = vpack.c.bf16 %v512, %v511
        %v515 = vld [vmem:[%s1] sm:$0xf]
        %v516 = vld [vmem:[%s1 + $0x4] sm:$0xf]
        %v517 = vld [vmem:[%s1 + $0x8] sm:$0xf]
        %v518 = vld [vmem:[%s1 + $0xc] sm:$0xf]
        %v519 = vld [vmem:[%s1 + $0x10] sm:$0xf]
        %v520 = vld [vmem:[%s1 + $0x14] sm:$0xf]
        %v521 = vld [vmem:[%s1 + $0x18] sm:$0xf]
        %v522 = vld [vmem:[%s1 + $0x1c] sm:$0xf]
        %v523 = vld [vmem:[%s1 + $0x20] sm:$0xf]
        %v524 = vld [vmem:[%s1 + $0x24] sm:$0xf]
        %v525 = vld [vmem:[%s1 + $0x28] sm:$0xf]
        %v526 = vld [vmem:[%s1 + $0x2c] sm:$0xf]
        %v527 = vld [vmem:[%s1 + $0x30] sm:$0xf]
        %v528 = vld [vmem:[%s1 + $0x34] sm:$0xf]
        %v529 = vld [vmem:[%s1 + $0x38] sm:$0xf]
        %v530 = vld [vmem:[%s1 + $0x3c] sm:$0xf]
        %v531 = vld [vmem:[%s1 + $0x40] sm:$0xf]
        %v532 = vld [vmem:[%s1 + $0x44] sm:$0xf]
        %v533 = vld [vmem:[%s1 + $0x48] sm:$0xf]
        %v534 = vld [vmem:[%s1 + $0x4c] sm:$0xf]
        %v535 = vld [vmem:[%s1 + $0x50] sm:$0xf]
        %v536 = vld [vmem:[%s1 + $0x54] sm:$0xf]
        %v537 = vld [vmem:[%s1 + $0x58] sm:$0xf]
        %v538 = vld [vmem:[%s1 + $0x5c] sm:$0xf]
        %v539 = vld [vmem:[%s1 + $0x60] sm:$0xf]
        %v540 = vld [vmem:[%s1 + $0x64] sm:$0xf]
        %v541 = vld [vmem:[%s1 + $0x68] sm:$0xf]
        %v542 = vld [vmem:[%s1 + $0x6c] sm:$0xf]
        %v543 = vld [vmem:[%s1 + $0x70] sm:$0xf]
        %v544 = vld [vmem:[%s1 + $0x74] sm:$0xf]
        %v545 = vld [vmem:[%s1 + $0x78] sm:$0xf]
        %v546 = vld [vmem:[%s1 + $0x7c] sm:$0xf]
        %v547 = vld [vmem:[%s2] sm:$0xff]
        %v548 = vld [vmem:[%s2 + $0x8] sm:$0xff]
        %v549 = vld [vmem:[%s2 + $0x10] sm:$0xff]
        %v550 = vld [vmem:[%s2 + $0x18] sm:$0xff]
        %v551 = vld [vmem:[%s2 + $0x20] sm:$0xff]
        %v552 = vld [vmem:[%s2 + $0x28] sm:$0xff]
        %v553 = vld [vmem:[%s2 + $0x30] sm:$0xff]
        %v554 = vld [vmem:[%s2 + $0x38] sm:$0xff]
        %v555 = vld [vmem:[%s2 + $0x40] sm:$0xff]
        %v556 = vld [vmem:[%s2 + $0x48] sm:$0xff]
        %v557 = vld [vmem:[%s2 + $0x50] sm:$0xff]
        %v558 = vld [vmem:[%s2 + $0x58] sm:$0xff]
        %v559 = vld [vmem:[%s2 + $0x60] sm:$0xff]
        %v560 = vld [vmem:[%s2 + $0x68] sm:$0xff]
        %v561 = vld [vmem:[%s2 + $0x70] sm:$0xff]
        %v562 = vld [vmem:[%s2 + $0x78] sm:$0xff]
        %v563 = vld [vmem:[%s2 + $0x80] sm:$0xff]
        %v564 = vld [vmem:[%s2 + $0x88] sm:$0xff]
        %v565 = vld [vmem:[%s2 + $0x90] sm:$0xff]
        %v566 = vld [vmem:[%s2 + $0x98] sm:$0xff]
        %v567 = vld [vmem:[%s2 + $0xa0] sm:$0xff]
        %v568 = vld [vmem:[%s2 + $0xa8] sm:$0xff]
        %v569 = vld [vmem:[%s2 + $0xb0] sm:$0xff]
        %v570 = vld [vmem:[%s2 + $0xb8] sm:$0xff]
        %v571 = vld [vmem:[%s2 + $0xc0] sm:$0xff]
        %v572 = vld [vmem:[%s2 + $0xc8] sm:$0xff]
        %v573 = vld [vmem:[%s2 + $0xd0] sm:$0xff]
        %v574 = vld [vmem:[%s2 + $0xd8] sm:$0xff]
        %v575 = vld [vmem:[%s2 + $0xe0] sm:$0xff]
        %v576 = vld [vmem:[%s2 + $0xe8] sm:$0xff]
        %v577 = vld [vmem:[%s2 + $0xf0] sm:$0xff]
        %v578 = vld [vmem:[%s2 + $0xf8] sm:$0xff]
        %580 = vset.pattern.permute.xlu0 0
        %581 = vperm.xlu0 %580, %v547
        %v582 = vpop.permute.xlu0 %581
        %585 = vset.pattern.permute.xlu0 0
        %586 = vperm.xlu0 %585, %v548
        %v587 = vpop.permute.xlu0 %586
        %590 = vset.pattern.permute.xlu0 0
        %591 = vperm.xlu0 %590, %v549
        %v592 = vpop.permute.xlu0 %591
        %595 = vset.pattern.permute.xlu0 0
        %596 = vperm.xlu0 %595, %v550
        %v597 = vpop.permute.xlu0 %596
        %600 = vset.pattern.permute.xlu0 0
        %601 = vperm.xlu0 %600, %v551
        %v602 = vpop.permute.xlu0 %601
        %605 = vset.pattern.permute.xlu0 0
        %606 = vperm.xlu0 %605, %v552
        %v607 = vpop.permute.xlu0 %606
        %610 = vset.pattern.permute.xlu0 0
        %611 = vperm.xlu0 %610, %v553
        %v612 = vpop.permute.xlu0 %611
        %615 = vset.pattern.permute.xlu0 0
        %616 = vperm.xlu0 %615, %v554
        %v617 = vpop.permute.xlu0 %616
        %620 = vset.pattern.permute.xlu0 0
        %621 = vperm.xlu0 %620, %v555
        %v622 = vpop.permute.xlu0 %621
        %625 = vset.pattern.permute.xlu0 0
        %626 = vperm.xlu0 %625, %v556
        %v627 = vpop.permute.xlu0 %626
        %630 = vset.pattern.permute.xlu0 0
        %631 = vperm.xlu0 %630, %v557
        %v632 = vpop.permute.xlu0 %631
        %635 = vset.pattern.permute.xlu0 0
        %636 = vperm.xlu0 %635, %v558
        %v637 = vpop.permute.xlu0 %636
        %640 = vset.pattern.permute.xlu0 0
        %641 = vperm.xlu0 %640, %v559
        %v642 = vpop.permute.xlu0 %641
        %645 = vset.pattern.permute.xlu0 0
        %646 = vperm.xlu0 %645, %v560
        %v647 = vpop.permute.xlu0 %646
        %650 = vset.pattern.permute.xlu0 0
        %651 = vperm.xlu0 %650, %v561
        %v652 = vpop.permute.xlu0 %651
        %655 = vset.pattern.permute.xlu0 0
        %656 = vperm.xlu0 %655, %v562
        %v657 = vpop.permute.xlu0 %656
        %660 = vset.pattern.permute.xlu0 0
        %661 = vperm.xlu0 %660, %v563
        %v662 = vpop.permute.xlu0 %661
        %665 = vset.pattern.permute.xlu0 0
        %666 = vperm.xlu0 %665, %v564
        %v667 = vpop.permute.xlu0 %666
        %670 = vset.pattern.permute.xlu0 0
        %671 = vperm.xlu0 %670, %v565
        %v672 = vpop.permute.xlu0 %671
        %675 = vset.pattern.permute.xlu0 0
        %676 = vperm.xlu0 %675, %v566
        %v677 = vpop.permute.xlu0 %676
        %680 = vset.pattern.permute.xlu0 0
        %681 = vperm.xlu0 %680, %v567
        %v682 = vpop.permute.xlu0 %681
        %685 = vset.pattern.permute.xlu0 0
        %686 = vperm.xlu0 %685, %v568
        %v687 = vpop.permute.xlu0 %686
        %690 = vset.pattern.permute.xlu0 0
        %691 = vperm.xlu0 %690, %v569
        %v692 = vpop.permute.xlu0 %691
        %695 = vset.pattern.permute.xlu0 0
        %696 = vperm.xlu0 %695, %v570
        %v697 = vpop.permute.xlu0 %696
        %700 = vset.pattern.permute.xlu0 0
        %701 = vperm.xlu0 %700, %v571
        %v702 = vpop.permute.xlu0 %701
        %705 = vset.pattern.permute.xlu0 0
        %706 = vperm.xlu0 %705, %v572
        %v707 = vpop.permute.xlu0 %706
        %710 = vset.pattern.permute.xlu0 0
        %711 = vperm.xlu0 %710, %v573
        %v712 = vpop.permute.xlu0 %711
        %715 = vset.pattern.permute.xlu0 0
        %716 = vperm.xlu0 %715, %v574
        %v717 = vpop.permute.xlu0 %716
        %720 = vset.pattern.permute.xlu0 0
        %721 = vperm.xlu0 %720, %v575
        %v722 = vpop.permute.xlu0 %721
        %725 = vset.pattern.permute.xlu0 0
        %726 = vperm.xlu0 %725, %v576
        %v727 = vpop.permute.xlu0 %726
        %730 = vset.pattern.permute.xlu0 0
        %731 = vperm.xlu0 %730, %v577
        %v732 = vpop.permute.xlu0 %731
        %735 = vset.pattern.permute.xlu0 0
        %736 = vperm.xlu0 %735, %v578
        %v737 = vpop.permute.xlu0 %736
        %v771 = vunpack.c.l.b16 %v515
        %v772 = vunpack.c.l.b16 %v516
        %v773 = vunpack.c.l.b16 %v517
        %v774 = vunpack.c.l.b16 %v518
        %v775 = vunpack.c.l.b16 %v519
        %v776 = vunpack.c.l.b16 %v520
        %v777 = vunpack.c.l.b16 %v521
        %v778 = vunpack.c.l.b16 %v522
        %v779 = vunpack.c.l.b16 %v523
        %v780 = vunpack.c.l.b16 %v524
        %v781 = vunpack.c.l.b16 %v525
        %v782 = vunpack.c.l.b16 %v526
        %v783 = vunpack.c.l.b16 %v527
        %v784 = vunpack.c.l.b16 %v528
        %v785 = vunpack.c.l.b16 %v529
        %v786 = vunpack.c.l.b16 %v530
        %v787 = vunpack.c.l.b16 %v531
        %v788 = vunpack.c.l.b16 %v532
        %v789 = vunpack.c.l.b16 %v533
        %v790 = vunpack.c.l.b16 %v534
        %v791 = vunpack.c.l.b16 %v535
        %v792 = vunpack.c.l.b16 %v536
        %v793 = vunpack.c.l.b16 %v537
        %v794 = vunpack.c.l.b16 %v538
        %v795 = vunpack.c.l.b16 %v539
        %v796 = vunpack.c.l.b16 %v540
        %v797 = vunpack.c.l.b16 %v541
        %v798 = vunpack.c.l.b16 %v542
        %v799 = vunpack.c.l.b16 %v543
        %v800 = vunpack.c.l.b16 %v544
        %v801 = vunpack.c.l.b16 %v545
        %v802 = vunpack.c.l.b16 %v546
        %v803 = vpack.c.b16 %v772, %v771
        %v804 = vpack.c.b16 %v774, %v773
        %v805 = vpack.c.b16 %v776, %v775
        %v806 = vpack.c.b16 %v778, %v777
        %v807 = vpack.c.b16 %v780, %v779
        %v808 = vpack.c.b16 %v782, %v781
        %v809 = vpack.c.b16 %v784, %v783
        %v810 = vpack.c.b16 %v786, %v785
        %v811 = vpack.c.b16 %v788, %v787
        %v812 = vpack.c.b16 %v790, %v789
        %v813 = vpack.c.b16 %v792, %v791
        %v814 = vpack.c.b16 %v794, %v793
        %v815 = vpack.c.b16 %v796, %v795
        %v816 = vpack.c.b16 %v798, %v797
        %v817 = vpack.c.b16 %v800, %v799
        %v818 = vpack.c.b16 %v802, %v801
        %vm819 = vcmask 220160
        %v821 = vsel %vm819, %v803, 0
        %v824 = vsel %vm819, %v804, 0
        %v827 = vsel %vm819, %v805, 0
        %v830 = vsel %vm819, %v806, 0
        %v833 = vsel %vm819, %v807, 0
        %v836 = vsel %vm819, %v808, 0
        %v839 = vsel %vm819, %v809, 0
        %v842 = vsel %vm819, %v810, 0
        %v845 = vsel %vm819, %v811, 0
        %v848 = vsel %vm819, %v812, 0
        %v851 = vsel %vm819, %v813, 0
        %v854 = vsel %vm819, %v814, 0
        %v857 = vsel %vm819, %v815, 0
        %v860 = vsel %vm819, %v816, 0
        %v863 = vsel %vm819, %v817, 0
        %v866 = vsel %vm819, %v818, 0
        %vm868 = vcmask 1044480
        %vm869 = vcmask 1045504
        %v870 = vsel %vm868, 4294967295, 65535
        %v871 = vsel %vm869, %v870, 0
        %v873 = vand.u32 %v514, %v871
        %875 = vmatprep.subr.bf16.mxu0 0
        %876 = vmatpush1.bf16.msra.mxu0 0
        %877 = vmatprep.subr.bf16.mxu0 0
        %878 = vmatpush1.bf16.msra.mxu0 0
        %879 = vmatprep.subr.bf16.mxu0 0
        %880 = vmatpush1.bf16.msra.mxu0 0
        %881 = vmatprep.subr.bf16.mxu0 0
        %882 = vmatpush1.bf16.msra.mxu0 0
        %883 = vmatprep.subr.bf16.mxu0 0
        %884 = vmatpush1.bf16.msra.mxu0 0
        %885 = vmatprep.subr.bf16.mxu0 0
        %886 = vmatpush1.bf16.msra.mxu0 0
        %887 = vmatprep.subr.bf16.mxu0 0
        %888 = vmatpush1.bf16.msra.mxu0 %v873
        %889 = vmatprep.subr.bf16.mxu0 0
        %890 = vmatpush1.bf16.msra.mxu0 %v513
        %891 = vmatprep.subr.bf16.mxu0 0
        %892 = vmatpush2.bf16.msra.mxu0 0
        %893 = vmatprep.subr.bf16.mxu0 0
        %894 = vmatpush2.bf16.msra.mxu0 0
        %895 = vmatprep.subr.bf16.mxu0 0
        %896 = vmatpush2.bf16.msra.mxu0 0
        %897 = vmatprep.subr.bf16.mxu0 0
        %898 = vmatpush2.bf16.msra.mxu0 0
        %899 = vmatprep.subr.bf16.mxu0 0
        %900 = vmatpush2.bf16.msra.mxu0 0
        %901 = vmatprep.subr.bf16.mxu0 0
        %902 = vmatpush2.bf16.msra.mxu0 0
        %903 = vmatprep.subr.bf16.mxu0 0
        %904 = vmatpush2.bf16.msra.mxu0 0
        %905 = vmatprep.subr.bf16.mxu0 0
        %906 = vmatpush2.bf16.msra.mxu0 0
        %907 = vmatprep.mubr.bf16.mxu0 0
        %908 = vmatmul.mubr.bf16.gmra.mxu0 %v821
        %v909 = vpop.f32.mrf.mxu0
        %v910 = vadd.f32 %v582, %v909
        %v911 = vpop.f32.mrf.mxu0
        %v912 = vpop.f32.mrf.mxu0
        %v913 = vadd.f32 %v587, %v912
        %v914 = vpop.f32.mrf.mxu0
        %915 = vmatprep.mubr.bf16.mxu0 0
        %916 = vmatmul.mubr.bf16.gmra.mxu0 %v824
        %v917 = vpop.f32.mrf.mxu0
        %v918 = vadd.f32 %v592, %v917
        %v919 = vpop.f32.mrf.mxu0
        %v920 = vpop.f32.mrf.mxu0
        %v921 = vadd.f32 %v597, %v920
        %v922 = vpop.f32.mrf.mxu0
        %923 = vmatprep.mubr.bf16.mxu0 0
        %924 = vmatmul.mubr.bf16.gmra.mxu0 %v827
        %v925 = vpop.f32.mrf.mxu0
        %v926 = vadd.f32 %v602, %v925
        %v927 = vpop.f32.mrf.mxu0
        %v928 = vpop.f32.mrf.mxu0
        %v929 = vadd.f32 %v607, %v928
        %v930 = vpop.f32.mrf.mxu0
        %931 = vmatprep.mubr.bf16.mxu0 0
        %932 = vmatmul.mubr.bf16.gmra.mxu0 %v830
        %v933 = vpop.f32.mrf.mxu0
        %v934 = vadd.f32 %v612, %v933
        %v935 = vpop.f32.mrf.mxu0
        %v936 = vpop.f32.mrf.mxu0
        %v937 = vadd.f32 %v617, %v936
        %v938 = vpop.f32.mrf.mxu0
        %939 = vmatprep.mubr.bf16.mxu0 0
        %940 = vmatmul.mubr.bf16.gmra.mxu0 %v833
        %v941 = vpop.f32.mrf.mxu0
        %v942 = vadd.f32 %v622, %v941
        %v943 = vpop.f32.mrf.mxu0
        %v944 = vpop.f32.mrf.mxu0
        %v945 = vadd.f32 %v627, %v944
        %v946 = vpop.f32.mrf.mxu0
        %947 = vmatprep.mubr.bf16.mxu0 0
        %948 = vmatmul.mubr.bf16.gmra.mxu0 %v836
        %v949 = vpop.f32.mrf.mxu0
        %v950 = vadd.f32 %v632, %v949
        %v951 = vpop.f32.mrf.mxu0
        %v952 = vpop.f32.mrf.mxu0
        %v953 = vadd.f32 %v637, %v952
        %v954 = vpop.f32.mrf.mxu0
        %955 = vmatprep.mubr.bf16.mxu0 0
        %956 = vmatmul.mubr.bf16.gmra.mxu0 %v839
        %v957 = vpop.f32.mrf.mxu0
        %v958 = vadd.f32 %v642, %v957
        %v959 = vpop.f32.mrf.mxu0
        %v960 = vpop.f32.mrf.mxu0
        %v961 = vadd.f32 %v647, %v960
        %v962 = vpop.f32.mrf.mxu0
        %963 = vmatprep.mubr.bf16.mxu0 0
        %964 = vmatmul.mubr.bf16.gmra.mxu0 %v842
        %v965 = vpop.f32.mrf.mxu0
        %v966 = vadd.f32 %v652, %v965
        %v967 = vpop.f32.mrf.mxu0
        %v968 = vpop.f32.mrf.mxu0
        %v969 = vadd.f32 %v657, %v968
        %v970 = vpop.f32.mrf.mxu0
        %971 = vmatprep.mubr.bf16.mxu0 0
        %972 = vmatmul.mubr.bf16.gmra.mxu0 %v845
        %v973 = vpop.f32.mrf.mxu0
        %v974 = vadd.f32 %v662, %v973
        %v975 = vpop.f32.mrf.mxu0
        %v976 = vpop.f32.mrf.mxu0
        %v977 = vadd.f32 %v667, %v976
        %v978 = vpop.f32.mrf.mxu0
        %979 = vmatprep.mubr.bf16.mxu0 0
        %980 = vmatmul.mubr.bf16.gmra.mxu0 %v848
        %v981 = vpop.f32.mrf.mxu0
        %v982 = vadd.f32 %v672, %v981
        %v983 = vpop.f32.mrf.mxu0
        %v984 = vpop.f32.mrf.mxu0
        %v985 = vadd.f32 %v677, %v984
        %v986 = vpop.f32.mrf.mxu0
        %987 = vmatprep.mubr.bf16.mxu0 0
        %988 = vmatmul.mubr.bf16.gmra.mxu0 %v851
        %v989 = vpop.f32.mrf.mxu0
        %v990 = vadd.f32 %v682, %v989
        %v991 = vpop.f32.mrf.mxu0
        %v992 = vpop.f32.mrf.mxu0
        %v993 = vadd.f32 %v687, %v992
        %v994 = vpop.f32.mrf.mxu0
        %995 = vmatprep.mubr.bf16.mxu0 0
        %996 = vmatmul.mubr.bf16.gmra.mxu0 %v854
        %v997 = vpop.f32.mrf.mxu0
        %v998 = vadd.f32 %v692, %v997
        %v999 = vpop.f32.mrf.mxu0
        %v1000 = vpop.f32.mrf.mxu0
        %v1001 = vadd.f32 %v697, %v1000
        %v1002 = vpop.f32.mrf.mxu0
        %1003 = vmatprep.mubr.bf16.mxu0 0
        %1004 = vmatmul.mubr.bf16.gmra.mxu0 %v857
        %v1005 = vpop.f32.mrf.mxu0
        %v1006 = vadd.f32 %v702, %v1005
        %v1007 = vpop.f32.mrf.mxu0
        %v1008 = vpop.f32.mrf.mxu0
        %v1009 = vadd.f32 %v707, %v1008
        %v1010 = vpop.f32.mrf.mxu0
        %1011 = vmatprep.mubr.bf16.mxu0 0
        %1012 = vmatmul.mubr.bf16.gmra.mxu0 %v860
        %v1013 = vpop.f32.mrf.mxu0
        %v1014 = vadd.f32 %v712, %v1013
        %v1015 = vpop.f32.mrf.mxu0
        %v1016 = vpop.f32.mrf.mxu0
        %v1017 = vadd.f32 %v717, %v1016
        %v1018 = vpop.f32.mrf.mxu0
        %1019 = vmatprep.mubr.bf16.mxu0 0
        %1020 = vmatmul.mubr.bf16.gmra.mxu0 %v863
        %v1021 = vpop.f32.mrf.mxu0
        %v1022 = vadd.f32 %v722, %v1021
        %v1023 = vpop.f32.mrf.mxu0
        %v1024 = vpop.f32.mrf.mxu0
        %v1025 = vadd.f32 %v727, %v1024
        %v1026 = vpop.f32.mrf.mxu0
        %1027 = vmatprep.mubr.bf16.mxu0 0
        %1028 = vmatmul.mubr.bf16.gmra.mxu0 %v866
        %v1029 = vpop.f32.mrf.mxu0
        %v1030 = vadd.f32 %v732, %v1029
        %v1031 = vpop.f32.mrf.mxu0
        %v1032 = vpop.f32.mrf.mxu0
        %v1033 = vadd.f32 %v737, %v1032
        %v1034 = vpop.f32.mrf.mxu0
        %1035 = vdwg.mxu0
        %v1036 = vmax.f32 %v910, 0.0
        %v1037 = vmax.f32 %v913, 0.0
        %v1038 = vmax.f32 %v918, 0.0
        %v1039 = vmax.f32 %v921, 0.0
        %v1040 = vmax.f32 %v926, 0.0
        %v1041 = vmax.f32 %v929, 0.0
        %v1042 = vmax.f32 %v934, 0.0
        %v1043 = vmax.f32 %v937, 0.0
        %v1044 = vmax.f32 %v942, 0.0
        %v1045 = vmax.f32 %v945, 0.0
        %v1046 = vmax.f32 %v950, 0.0
        %v1047 = vmax.f32 %v953, 0.0
        %v1048 = vmax.f32 %v958, 0.0
        %v1049 = vmax.f32 %v961, 0.0
        %v1050 = vmax.f32 %v966, 0.0
        %v1051 = vmax.f32 %v969, 0.0
        %v1052 = vmax.f32 %v974, 0.0
        %v1053 = vmax.f32 %v977, 0.0
        %v1054 = vmax.f32 %v982, 0.0
        %v1055 = vmax.f32 %v985, 0.0
        %v1056 = vmax.f32 %v990, 0.0
        %v1057 = vmax.f32 %v993, 0.0
        %v1058 = vmax.f32 %v998, 0.0
        %v1059 = vmax.f32 %v1001, 0.0
        %v1060 = vmax.f32 %v1006, 0.0
        %v1061 = vmax.f32 %v1009, 0.0
        %v1062 = vmax.f32 %v1014, 0.0
        %v1063 = vmax.f32 %v1017, 0.0
        %v1064 = vmax.f32 %v1022, 0.0
        %v1065 = vmax.f32 %v1025, 0.0
        %v1066 = vmax.f32 %v1030, 0.0
        %v1067 = vmax.f32 %v1033, 0.0
        %v1068 = vld [vmem:[%s3] sm:$0xff]
        %v1069 = vld [vmem:[%s3 + $0x8] sm:$0xff]
        %v1070 = vld [vmem:[%s3 + $0x10] sm:$0xff]
        %v1071 = vld [vmem:[%s3 + $0x18] sm:$0xff]
        %v1072 = vld [vmem:[%s3 + $0x20] sm:$0xff]
        %v1073 = vld [vmem:[%s3 + $0x28] sm:$0xff]
        %v1074 = vld [vmem:[%s3 + $0x30] sm:$0xff]
        %v1075 = vld [vmem:[%s3 + $0x38] sm:$0xff]
        %v1076 = vld [vmem:[%s3 + $0x40] sm:$0xff]
        %v1077 = vld [vmem:[%s3 + $0x48] sm:$0xff]
        %v1078 = vld [vmem:[%s3 + $0x50] sm:$0xff]
        %v1079 = vld [vmem:[%s3 + $0x58] sm:$0xff]
        %v1080 = vld [vmem:[%s3 + $0x60] sm:$0xff]
        %v1081 = vld [vmem:[%s3 + $0x68] sm:$0xff]
        %v1082 = vld [vmem:[%s3 + $0x70] sm:$0xff]
        %v1083 = vld [vmem:[%s3 + $0x78] sm:$0xff]
        %v1084 = vld [vmem:[%s3 + $0x80] sm:$0xff]
        %v1085 = vld [vmem:[%s3 + $0x88] sm:$0xff]
        %v1086 = vld [vmem:[%s3 + $0x90] sm:$0xff]
        %v1087 = vld [vmem:[%s3 + $0x98] sm:$0xff]
        %v1088 = vld [vmem:[%s3 + $0xa0] sm:$0xff]
        %v1089 = vld [vmem:[%s3 + $0xa8] sm:$0xff]
        %v1090 = vld [vmem:[%s3 + $0xb0] sm:$0xff]
        %v1091 = vld [vmem:[%s3 + $0xb8] sm:$0xff]
        %v1092 = vld [vmem:[%s3 + $0xc0] sm:$0xff]
        %v1093 = vld [vmem:[%s3 + $0xc8] sm:$0xff]
        %v1094 = vld [vmem:[%s3 + $0xd0] sm:$0xff]
        %v1095 = vld [vmem:[%s3 + $0xd8] sm:$0xff]
        %v1096 = vld [vmem:[%s3 + $0xe0] sm:$0xff]
        %v1097 = vld [vmem:[%s3 + $0xe8] sm:$0xff]
        %v1098 = vld [vmem:[%s3 + $0xf0] sm:$0xff]
        %v1099 = vld [vmem:[%s3 + $0xf8] sm:$0xff]
        %v1100 = vpack.c.bf16 %v1037, %v1036
        %v1101 = vpack.c.bf16 %v1039, %v1038
        %v1102 = vpack.c.bf16 %v1041, %v1040
        %v1103 = vpack.c.bf16 %v1043, %v1042
        %v1104 = vpack.c.bf16 %v1045, %v1044
        %v1105 = vpack.c.bf16 %v1047, %v1046
        %v1106 = vpack.c.bf16 %v1049, %v1048
        %v1107 = vpack.c.bf16 %v1051, %v1050
        %v1108 = vpack.c.bf16 %v1053, %v1052
        %v1109 = vpack.c.bf16 %v1055, %v1054
        %v1110 = vpack.c.bf16 %v1057, %v1056
        %v1111 = vpack.c.bf16 %v1059, %v1058
        %v1112 = vpack.c.bf16 %v1061, %v1060
        %v1113 = vpack.c.bf16 %v1063, %v1062
        %v1114 = vpack.c.bf16 %v1065, %v1064
        %v1115 = vpack.c.bf16 %v1067, %v1066
        %v1116 = vld [vmem:[%s4] sm:$0xff]
        %v1117 = vld [vmem:[%s4 + $0x8] sm:$0xff]
        %v1118 = vld [vmem:[%s4 + $0x10] sm:$0xff]
        %v1119 = vld [vmem:[%s4 + $0x18] sm:$0xff]
        %v1120 = vld [vmem:[%s4 + $0x20] sm:$0xff]
        %v1121 = vld [vmem:[%s4 + $0x28] sm:$0xff]
        %v1122 = vld [vmem:[%s4 + $0x30] sm:$0xff]
        %v1123 = vld [vmem:[%s4 + $0x38] sm:$0xff]
        %v1124 = vld [vmem:[%s4 + $0x40] sm:$0xff]
        %v1125 = vld [vmem:[%s4 + $0x48] sm:$0xff]
        %v1126 = vld [vmem:[%s4 + $0x50] sm:$0xff]
        %v1127 = vld [vmem:[%s4 + $0x58] sm:$0xff]
        %v1128 = vld [vmem:[%s4 + $0x60] sm:$0xff]
        %v1129 = vld [vmem:[%s4 + $0x68] sm:$0xff]
        %v1130 = vld [vmem:[%s4 + $0x70] sm:$0xff]
        %v1131 = vld [vmem:[%s4 + $0x78] sm:$0xff]
        %v1132 = vld [vmem:[%s4 + $0x80] sm:$0xff]
        %v1133 = vld [vmem:[%s4 + $0x88] sm:$0xff]
        %v1134 = vld [vmem:[%s4 + $0x90] sm:$0xff]
        %v1135 = vld [vmem:[%s4 + $0x98] sm:$0xff]
        %v1136 = vld [vmem:[%s4 + $0xa0] sm:$0xff]
        %v1137 = vld [vmem:[%s4 + $0xa8] sm:$0xff]
        %v1138 = vld [vmem:[%s4 + $0xb0] sm:$0xff]
        %v1139 = vld [vmem:[%s4 + $0xb8] sm:$0xff]
        %v1140 = vld [vmem:[%s4 + $0xc0] sm:$0xff]
        %v1141 = vld [vmem:[%s4 + $0xc8] sm:$0xff]
        %v1142 = vld [vmem:[%s4 + $0xd0] sm:$0xff]
        %v1143 = vld [vmem:[%s4 + $0xd8] sm:$0xff]
        %v1144 = vld [vmem:[%s4 + $0xe0] sm:$0xff]
        %v1145 = vld [vmem:[%s4 + $0xe8] sm:$0xff]
        %v1146 = vld [vmem:[%s4 + $0xf0] sm:$0xff]
        %v1147 = vld [vmem:[%s4 + $0xf8] sm:$0xff]
        %1149 = vset.pattern.permute.xlu0 0
        %1150 = vperm.xlu0 %1149, %v1116
        %v1151 = vpop.permute.xlu0 %1150
        %1154 = vset.pattern.permute.xlu0 0
        %1155 = vperm.xlu0 %1154, %v1117
        %v1156 = vpop.permute.xlu0 %1155
        %1159 = vset.pattern.permute.xlu0 0
        %1160 = vperm.xlu0 %1159, %v1118
        %v1161 = vpop.permute.xlu0 %1160
        %1164 = vset.pattern.permute.xlu0 0
        %1165 = vperm.xlu0 %1164, %v1119
        %v1166 = vpop.permute.xlu0 %1165
        %1169 = vset.pattern.permute.xlu0 0
        %1170 = vperm.xlu0 %1169, %v1120
        %v1171 = vpop.permute.xlu0 %1170
        %1174 = vset.pattern.permute.xlu0 0
        %1175 = vperm.xlu0 %1174, %v1121
        %v1176 = vpop.permute.xlu0 %1175
        %1179 = vset.pattern.permute.xlu0 0
        %1180 = vperm.xlu0 %1179, %v1122
        %v1181 = vpop.permute.xlu0 %1180
        %1184 = vset.pattern.permute.xlu0 0
        %1185 = vperm.xlu0 %1184, %v1123
        %v1186 = vpop.permute.xlu0 %1185
        %1189 = vset.pattern.permute.xlu0 0
        %1190 = vperm.xlu0 %1189, %v1124
        %v1191 = vpop.permute.xlu0 %1190
        %1194 = vset.pattern.permute.xlu0 0
        %1195 = vperm.xlu0 %1194, %v1125
        %v1196 = vpop.permute.xlu0 %1195
        %1199 = vset.pattern.permute.xlu0 0
        %1200 = vperm.xlu0 %1199, %v1126
        %v1201 = vpop.permute.xlu0 %1200
        %1204 = vset.pattern.permute.xlu0 0
        %1205 = vperm.xlu0 %1204, %v1127
        %v1206 = vpop.permute.xlu0 %1205
        %1209 = vset.pattern.permute.xlu0 0
        %1210 = vperm.xlu0 %1209, %v1128
        %v1211 = vpop.permute.xlu0 %1210
        %1214 = vset.pattern.permute.xlu0 0
        %1215 = vperm.xlu0 %1214, %v1129
        %v1216 = vpop.permute.xlu0 %1215
        %1219 = vset.pattern.permute.xlu0 0
        %1220 = vperm.xlu0 %1219, %v1130
        %v1221 = vpop.permute.xlu0 %1220
        %1224 = vset.pattern.permute.xlu0 0
        %1225 = vperm.xlu0 %1224, %v1131
        %v1226 = vpop.permute.xlu0 %1225
        %1229 = vset.pattern.permute.xlu0 0
        %1230 = vperm.xlu0 %1229, %v1132
        %v1231 = vpop.permute.xlu0 %1230
        %1234 = vset.pattern.permute.xlu0 0
        %1235 = vperm.xlu0 %1234, %v1133
        %v1236 = vpop.permute.xlu0 %1235
        %1239 = vset.pattern.permute.xlu0 0
        %1240 = vperm.xlu0 %1239, %v1134
        %v1241 = vpop.permute.xlu0 %1240
        %1244 = vset.pattern.permute.xlu0 0
        %1245 = vperm.xlu0 %1244, %v1135
        %v1246 = vpop.permute.xlu0 %1245
        %1249 = vset.pattern.permute.xlu0 0
        %1250 = vperm.xlu0 %1249, %v1136
        %v1251 = vpop.permute.xlu0 %1250
        %1254 = vset.pattern.permute.xlu0 0
        %1255 = vperm.xlu0 %1254, %v1137
        %v1256 = vpop.permute.xlu0 %1255
        %1259 = vset.pattern.permute.xlu0 0
        %1260 = vperm.xlu0 %1259, %v1138
        %v1261 = vpop.permute.xlu0 %1260
        %1264 = vset.pattern.permute.xlu0 0
        %1265 = vperm.xlu0 %1264, %v1139
        %v1266 = vpop.permute.xlu0 %1265
        %1269 = vset.pattern.permute.xlu0 0
        %1270 = vperm.xlu0 %1269, %v1140
        %v1271 = vpop.permute.xlu0 %1270
        %1274 = vset.pattern.permute.xlu0 0
        %1275 = vperm.xlu0 %1274, %v1141
        %v1276 = vpop.permute.xlu0 %1275
        %1279 = vset.pattern.permute.xlu0 0
        %1280 = vperm.xlu0 %1279, %v1142
        %v1281 = vpop.permute.xlu0 %1280
        %1284 = vset.pattern.permute.xlu0 0
        %1285 = vperm.xlu0 %1284, %v1143
        %v1286 = vpop.permute.xlu0 %1285
        %1289 = vset.pattern.permute.xlu0 0
        %1290 = vperm.xlu0 %1289, %v1144
        %v1291 = vpop.permute.xlu0 %1290
        %1294 = vset.pattern.permute.xlu0 0
        %1295 = vperm.xlu0 %1294, %v1145
        %v1296 = vpop.permute.xlu0 %1295
        %1299 = vset.pattern.permute.xlu0 0
        %1300 = vperm.xlu0 %1299, %v1146
        %v1301 = vpop.permute.xlu0 %1300
        %1304 = vset.pattern.permute.xlu0 0
        %1305 = vperm.xlu0 %1304, %v1147
        %v1306 = vpop.permute.xlu0 %1305
        %v1340 = vunpack.c.l.b16 %v1068
        %v1341 = vunpack.c.h.b16 %v1068
        %v1342 = vunpack.c.l.b16 %v1069
        %v1343 = vunpack.c.h.b16 %v1069
        %v1344 = vunpack.c.l.b16 %v1070
        %v1345 = vunpack.c.h.b16 %v1070
        %v1346 = vunpack.c.l.b16 %v1071
        %v1347 = vunpack.c.h.b16 %v1071
        %v1348 = vunpack.c.l.b16 %v1072
        %v1349 = vunpack.c.h.b16 %v1072
        %v1350 = vunpack.c.l.b16 %v1073
        %v1351 = vunpack.c.h.b16 %v1073
        %v1352 = vunpack.c.l.b16 %v1074
        %v1353 = vunpack.c.h.b16 %v1074
        %v1354 = vunpack.c.l.b16 %v1075
        %v1355 = vunpack.c.h.b16 %v1075
        %v1356 = vunpack.c.l.b16 %v1076
        %v1357 = vunpack.c.h.b16 %v1076
        %v1358 = vunpack.c.l.b16 %v1077
        %v1359 = vunpack.c.h.b16 %v1077
        %v1360 = vunpack.c.l.b16 %v1078
        %v1361 = vunpack.c.h.b16 %v1078
        %v1362 = vunpack.c.l.b16 %v1079
        %v1363 = vunpack.c.h.b16 %v1079
        %v1364 = vunpack.c.l.b16 %v1080
        %v1365 = vunpack.c.h.b16 %v1080
        %v1366 = vunpack.c.l.b16 %v1081
        %v1367 = vunpack.c.h.b16 %v1081
        %v1368 = vunpack.c.l.b16 %v1082
        %v1369 = vunpack.c.h.b16 %v1082
        %v1370 = vunpack.c.l.b16 %v1083
        %v1371 = vunpack.c.h.b16 %v1083
        %v1372 = vunpack.c.l.b16 %v1084
        %v1373 = vunpack.c.h.b16 %v1084
        %v1374 = vunpack.c.l.b16 %v1085
        %v1375 = vunpack.c.h.b16 %v1085
        %v1376 = vunpack.c.l.b16 %v1086
        %v1377 = vunpack.c.h.b16 %v1086
        %v1378 = vunpack.c.l.b16 %v1087
        %v1379 = vunpack.c.h.b16 %v1087
        %v1380 = vunpack.c.l.b16 %v1088
        %v1381 = vunpack.c.h.b16 %v1088
        %v1382 = vunpack.c.l.b16 %v1089
        %v1383 = vunpack.c.h.b16 %v1089
        %v1384 = vunpack.c.l.b16 %v1090
        %v1385 = vunpack.c.h.b16 %v1090
        %v1386 = vunpack.c.l.b16 %v1091
        %v1387 = vunpack.c.h.b16 %v1091
        %v1388 = vunpack.c.l.b16 %v1092
        %v1389 = vunpack.c.h.b16 %v1092
        %v1390 = vunpack.c.l.b16 %v1093
        %v1391 = vunpack.c.h.b16 %v1093
        %v1392 = vunpack.c.l.b16 %v1094
        %v1393 = vunpack.c.h.b16 %v1094
        %v1394 = vunpack.c.l.b16 %v1095
        %v1395 = vunpack.c.h.b16 %v1095
        %v1396 = vunpack.c.l.b16 %v1096
        %v1397 = vunpack.c.h.b16 %v1096
        %v1398 = vunpack.c.l.b16 %v1097
        %v1399 = vunpack.c.h.b16 %v1097
        %v1400 = vunpack.c.l.b16 %v1098
        %v1401 = vunpack.c.h.b16 %v1098
        %v1402 = vunpack.c.l.b16 %v1099
        %v1403 = vunpack.c.h.b16 %v1099
        %v1404 = vpack.c.b16 %v1342, %v1340
        %v1405 = vpack.c.b16 %v1343, %v1341
        %v1406 = vpack.c.b16 %v1346, %v1344
        %v1407 = vpack.c.b16 %v1347, %v1345
        %v1408 = vpack.c.b16 %v1350, %v1348
        %v1409 = vpack.c.b16 %v1351, %v1349
        %v1410 = vpack.c.b16 %v1354, %v1352
        %v1411 = vpack.c.b16 %v1355, %v1353
        %v1412 = vpack.c.b16 %v1358, %v1356
        %v1413 = vpack.c.b16 %v1359, %v1357
        %v1414 = vpack.c.b16 %v1362, %v1360
        %v1415 = vpack.c.b16 %v1363, %v1361
        %v1416 = vpack.c.b16 %v1366, %v1364
        %v1417 = vpack.c.b16 %v1367, %v1365
        %v1418 = vpack.c.b16 %v1370, %v1368
        %v1419 = vpack.c.b16 %v1371, %v1369
        %v1420 = vpack.c.b16 %v1374, %v1372
        %v1421 = vpack.c.b16 %v1375, %v1373
        %v1422 = vpack.c.b16 %v1378, %v1376
        %v1423 = vpack.c.b16 %v1379, %v1377
        %v1424 = vpack.c.b16 %v1382, %v1380
        %v1425 = vpack.c.b16 %v1383, %v1381
        %v1426 = vpack.c.b16 %v1386, %v1384
        %v1427 = vpack.c.b16 %v1387, %v1385
        %v1428 = vpack.c.b16 %v1390, %v1388
        %v1429 = vpack.c.b16 %v1391, %v1389
        %v1430 = vpack.c.b16 %v1394, %v1392
        %v1431 = vpack.c.b16 %v1395, %v1393
        %v1432 = vpack.c.b16 %v1398, %v1396
        %v1433 = vpack.c.b16 %v1399, %v1397
        %v1434 = vpack.c.b16 %v1402, %v1400
        %v1435 = vpack.c.b16 %v1403, %v1401
        %1468 = vmatprep.subr.bf16.mxu0 0
        %1469 = vmatpush1.bf16.msra.mxu0 %v1107
        %1470 = vmatprep.subr.bf16.mxu0 0
        %1471 = vmatpush1.bf16.msra.mxu0 %v1106
        %1472 = vmatprep.subr.bf16.mxu0 0
        %1473 = vmatpush1.bf16.msra.mxu0 %v1105
        %1474 = vmatprep.subr.bf16.mxu0 0
        %1475 = vmatpush1.bf16.msra.mxu0 %v1104
        %1476 = vmatprep.subr.bf16.mxu0 0
        %1477 = vmatpush1.bf16.msra.mxu0 %v1103
        %1478 = vmatprep.subr.bf16.mxu0 0
        %1479 = vmatpush1.bf16.msra.mxu0 %v1102
        %1480 = vmatprep.subr.bf16.mxu0 0
        %1481 = vmatpush1.bf16.msra.mxu0 %v1101
        %1482 = vmatprep.subr.bf16.mxu0 0
        %1483 = vmatpush1.bf16.msra.mxu0 %v1100
        %1484 = vmatprep.subr.bf16.mxu0 0
        %1485 = vmatpush2.bf16.msra.mxu0 %v1115
        %1486 = vmatprep.subr.bf16.mxu0 0
        %1487 = vmatpush2.bf16.msra.mxu0 %v1114
        %1488 = vmatprep.subr.bf16.mxu0 0
        %1489 = vmatpush2.bf16.msra.mxu0 %v1113
        %1490 = vmatprep.subr.bf16.mxu0 0
        %1491 = vmatpush2.bf16.msra.mxu0 %v1112
        %1492 = vmatprep.subr.bf16.mxu0 0
        %1493 = vmatpush2.bf16.msra.mxu0 %v1111
        %1494 = vmatprep.subr.bf16.mxu0 0
        %1495 = vmatpush2.bf16.msra.mxu0 %v1110
        %1496 = vmatprep.subr.bf16.mxu0 0
        %1497 = vmatpush2.bf16.msra.mxu0 %v1109
        %1498 = vmatprep.subr.bf16.mxu0 0
        %1499 = vmatpush2.bf16.msra.mxu0 %v1108
        %1500 = vmatprep.mubr.bf16.mxu0 %v1405
        %1501 = vmatmul.mubr.bf16.gmra.mxu0 %v1404
        %v1502 = vpop.f32.mrf.mxu0
        %v1503 = vadd.f32 %v1151, %v1502
        %v1504 = vpop.f32.mrf.mxu0
        %v1505 = vpop.f32.mrf.mxu0
        %v1506 = vadd.f32 %v1156, %v1505
        %v1507 = vpop.f32.mrf.mxu0
        %1508 = vmatprep.mubr.bf16.mxu0 %v1407
        %1509 = vmatmul.mubr.bf16.gmra.mxu0 %v1406
        %v1510 = vpop.f32.mrf.mxu0
        %v1511 = vadd.f32 %v1161, %v1510
        %v1512 = vpop.f32.mrf.mxu0
        %v1513 = vpop.f32.mrf.mxu0
        %v1514 = vadd.f32 %v1166, %v1513
        %v1515 = vpop.f32.mrf.mxu0
        %1516 = vmatprep.mubr.bf16.mxu0 %v1409
        %1517 = vmatmul.mubr.bf16.gmra.mxu0 %v1408
        %v1518 = vpop.f32.mrf.mxu0
        %v1519 = vadd.f32 %v1171, %v1518
        %v1520 = vpop.f32.mrf.mxu0
        %v1521 = vpop.f32.mrf.mxu0
        %v1522 = vadd.f32 %v1176, %v1521
        %v1523 = vpop.f32.mrf.mxu0
        %1524 = vmatprep.mubr.bf16.mxu0 %v1411
        %1525 = vmatmul.mubr.bf16.gmra.mxu0 %v1410
        %v1526 = vpop.f32.mrf.mxu0
        %v1527 = vadd.f32 %v1181, %v1526
        %v1528 = vpop.f32.mrf.mxu0
        %v1529 = vpop.f32.mrf.mxu0
        %v1530 = vadd.f32 %v1186, %v1529
        %v1531 = vpop.f32.mrf.mxu0
        %1532 = vmatprep.mubr.bf16.mxu0 %v1413
        %1533 = vmatmul.mubr.bf16.gmra.mxu0 %v1412
        %v1534 = vpop.f32.mrf.mxu0
        %v1535 = vadd.f32 %v1191, %v1534
        %v1536 = vpop.f32.mrf.mxu0
        %v1537 = vpop.f32.mrf.mxu0
        %v1538 = vadd.f32 %v1196, %v1537
        %v1539 = vpop.f32.mrf.mxu0
        %1540 = vmatprep.mubr.bf16.mxu0 %v1415
        %1541 = vmatmul.mubr.bf16.gmra.mxu0 %v1414
        %v1542 = vpop.f32.mrf.mxu0
        %v1543 = vadd.f32 %v1201, %v1542
        %v1544 = vpop.f32.mrf.mxu0
        %v1545 = vpop.f32.mrf.mxu0
        %v1546 = vadd.f32 %v1206, %v1545
        %v1547 = vpop.f32.mrf.mxu0
        %1548 = vmatprep.mubr.bf16.mxu0 %v1417
        %1549 = vmatmul.mubr.bf16.gmra.mxu0 %v1416
        %v1550 = vpop.f32.mrf.mxu0
        %v1551 = vadd.f32 %v1211, %v1550
        %v1552 = vpop.f32.mrf.mxu0
        %v1553 = vpop.f32.mrf.mxu0
        %v1554 = vadd.f32 %v1216, %v1553
        %v1555 = vpop.f32.mrf.mxu0
        %1556 = vmatprep.mubr.bf16.mxu0 %v1419
        %1557 = vmatmul.mubr.bf16.gmra.mxu0 %v1418
        %v1558 = vpop.f32.mrf.mxu0
        %v1559 = vadd.f32 %v1221, %v1558
        %v1560 = vpop.f32.mrf.mxu0
        %v1561 = vpop.f32.mrf.mxu0
        %v1562 = vadd.f32 %v1226, %v1561
        %v1563 = vpop.f32.mrf.mxu0
        %1564 = vmatprep.mubr.bf16.mxu0 %v1421
        %1565 = vmatmul.mubr.bf16.gmra.mxu0 %v1420
        %v1566 = vpop.f32.mrf.mxu0
        %v1567 = vadd.f32 %v1231, %v1566
        %v1568 = vpop.f32.mrf.mxu0
        %v1569 = vpop.f32.mrf.mxu0
        %v1570 = vadd.f32 %v1236, %v1569
        %v1571 = vpop.f32.mrf.mxu0
        %1572 = vmatprep.mubr.bf16.mxu0 %v1423
        %1573 = vmatmul.mubr.bf16.gmra.mxu0 %v1422
        %v1574 = vpop.f32.mrf.mxu0
        %v1575 = vadd.f32 %v1241, %v1574
        %v1576 = vpop.f32.mrf.mxu0
        %v1577 = vpop.f32.mrf.mxu0
        %v1578 = vadd.f32 %v1246, %v1577
        %v1579 = vpop.f32.mrf.mxu0
        %1580 = vmatprep.mubr.bf16.mxu0 %v1425
        %1581 = vmatmul.mubr.bf16.gmra.mxu0 %v1424
        %v1582 = vpop.f32.mrf.mxu0
        %v1583 = vadd.f32 %v1251, %v1582
        %v1584 = vpop.f32.mrf.mxu0
        %v1585 = vpop.f32.mrf.mxu0
        %v1586 = vadd.f32 %v1256, %v1585
        %v1587 = vpop.f32.mrf.mxu0
        %1588 = vmatprep.mubr.bf16.mxu0 %v1427
        %1589 = vmatmul.mubr.bf16.gmra.mxu0 %v1426
        %v1590 = vpop.f32.mrf.mxu0
        %v1591 = vadd.f32 %v1261, %v1590
        %v1592 = vpop.f32.mrf.mxu0
        %v1593 = vpop.f32.mrf.mxu0
        %v1594 = vadd.f32 %v1266, %v1593
        %v1595 = vpop.f32.mrf.mxu0
        %1596 = vmatprep.mubr.bf16.mxu0 %v1429
        %1597 = vmatmul.mubr.bf16.gmra.mxu0 %v1428
        %v1598 = vpop.f32.mrf.mxu0
        %v1599 = vadd.f32 %v1271, %v1598
        %v1600 = vpop.f32.mrf.mxu0
        %v1601 = vpop.f32.mrf.mxu0
        %v1602 = vadd.f32 %v1276, %v1601
        %v1603 = vpop.f32.mrf.mxu0
        %1604 = vmatprep.mubr.bf16.mxu0 %v1431
        %1605 = vmatmul.mubr.bf16.gmra.mxu0 %v1430
        %v1606 = vpop.f32.mrf.mxu0
        %v1607 = vadd.f32 %v1281, %v1606
        %v1608 = vpop.f32.mrf.mxu0
        %v1609 = vpop.f32.mrf.mxu0
        %v1610 = vadd.f32 %v1286, %v1609
        %v1611 = vpop.f32.mrf.mxu0
        %1612 = vmatprep.mubr.bf16.mxu0 %v1433
        %1613 = vmatmul.mubr.bf16.gmra.mxu0 %v1432
        %v1614 = vpop.f32.mrf.mxu0
        %v1615 = vadd.f32 %v1291, %v1614
        %v1616 = vpop.f32.mrf.mxu0
        %v1617 = vpop.f32.mrf.mxu0
        %v1618 = vadd.f32 %v1296, %v1617
        %v1619 = vpop.f32.mrf.mxu0
        %1620 = vmatprep.mubr.bf16.mxu0 %v1435
        %1621 = vmatmul.mubr.bf16.gmra.mxu0 %v1434
        %v1622 = vpop.f32.mrf.mxu0
        %v1623 = vadd.f32 %v1301, %v1622
        %v1624 = vpop.f32.mrf.mxu0
        %v1625 = vpop.f32.mrf.mxu0
        %v1626 = vadd.f32 %v1306, %v1625
        %v1627 = vpop.f32.mrf.mxu0
        %1628 = vdwg.mxu0
        %v1629 = vmax.f32 %v1503, 0.0
        %v1630 = vmax.f32 %v1506, 0.0
        %v1631 = vmax.f32 %v1511, 0.0
        %v1632 = vmax.f32 %v1514, 0.0
        %v1633 = vmax.f32 %v1519, 0.0
        %v1634 = vmax.f32 %v1522, 0.0
        %v1635 = vmax.f32 %v1527, 0.0
        %v1636 = vmax.f32 %v1530, 0.0
        %v1637 = vmax.f32 %v1535, 0.0
        %v1638 = vmax.f32 %v1538, 0.0
        %v1639 = vmax.f32 %v1543, 0.0
        %v1640 = vmax.f32 %v1546, 0.0
        %v1641 = vmax.f32 %v1551, 0.0
        %v1642 = vmax.f32 %v1554, 0.0
        %v1643 = vmax.f32 %v1559, 0.0
        %v1644 = vmax.f32 %v1562, 0.0
        %v1645 = vmax.f32 %v1567, 0.0
        %v1646 = vmax.f32 %v1570, 0.0
        %v1647 = vmax.f32 %v1575, 0.0
        %v1648 = vmax.f32 %v1578, 0.0
        %v1649 = vmax.f32 %v1583, 0.0
        %v1650 = vmax.f32 %v1586, 0.0
        %v1651 = vmax.f32 %v1591, 0.0
        %v1652 = vmax.f32 %v1594, 0.0
        %v1653 = vmax.f32 %v1599, 0.0
        %v1654 = vmax.f32 %v1602, 0.0
        %v1655 = vmax.f32 %v1607, 0.0
        %v1656 = vmax.f32 %v1610, 0.0
        %v1657 = vmax.f32 %v1615, 0.0
        %v1658 = vmax.f32 %v1618, 0.0
        %v1659 = vmax.f32 %v1623, 0.0
        %v1660 = vmax.f32 %v1626, 0.0
        %s1661 = scalar_lea.vmem %s3, 256
        %v1662 = vld [vmem:[%s1661] sm:$0xff]
        %v1663 = vld [vmem:[%s1661 + $0x8] sm:$0xff]
        %v1664 = vld [vmem:[%s1661 + $0x10] sm:$0xff]
        %v1665 = vld [vmem:[%s1661 + $0x18] sm:$0xff]
        %v1666 = vld [vmem:[%s1661 + $0x20] sm:$0xff]
        %v1667 = vld [vmem:[%s1661 + $0x28] sm:$0xff]
        %v1668 = vld [vmem:[%s1661 + $0x30] sm:$0xff]
        %v1669 = vld [vmem:[%s1661 + $0x38] sm:$0xff]
        %v1670 = vld [vmem:[%s1661 + $0x40] sm:$0xff]
        %v1671 = vld [vmem:[%s1661 + $0x48] sm:$0xff]
        %v1672 = vld [vmem:[%s1661 + $0x50] sm:$0xff]
        %v1673 = vld [vmem:[%s1661 + $0x58] sm:$0xff]
        %v1674 = vld [vmem:[%s1661 + $0x60] sm:$0xff]
        %v1675 = vld [vmem:[%s1661 + $0x68] sm:$0xff]
        %v1676 = vld [vmem:[%s1661 + $0x70] sm:$0xff]
        %v1677 = vld [vmem:[%s1661 + $0x78] sm:$0xff]
        %v1678 = vld [vmem:[%s1661 + $0x80] sm:$0xff]
        %v1679 = vld [vmem:[%s1661 + $0x88] sm:$0xff]
        %v1680 = vld [vmem:[%s1661 + $0x90] sm:$0xff]
        %v1681 = vld [vmem:[%s1661 + $0x98] sm:$0xff]
        %v1682 = vld [vmem:[%s1661 + $0xa0] sm:$0xff]
        %v1683 = vld [vmem:[%s1661 + $0xa8] sm:$0xff]
        %v1684 = vld [vmem:[%s1661 + $0xb0] sm:$0xff]
        %v1685 = vld [vmem:[%s1661 + $0xb8] sm:$0xff]
        %v1686 = vld [vmem:[%s1661 + $0xc0] sm:$0xff]
        %v1687 = vld [vmem:[%s1661 + $0xc8] sm:$0xff]
        %v1688 = vld [vmem:[%s1661 + $0xd0] sm:$0xff]
        %v1689 = vld [vmem:[%s1661 + $0xd8] sm:$0xff]
        %v1690 = vld [vmem:[%s1661 + $0xe0] sm:$0xff]
        %v1691 = vld [vmem:[%s1661 + $0xe8] sm:$0xff]
        %v1692 = vld [vmem:[%s1661 + $0xf0] sm:$0xff]
        %v1693 = vld [vmem:[%s1661 + $0xf8] sm:$0xff]
        %v1694 = vpack.c.bf16 %v1630, %v1629
        %v1695 = vpack.c.bf16 %v1632, %v1631
        %v1696 = vpack.c.bf16 %v1634, %v1633
        %v1697 = vpack.c.bf16 %v1636, %v1635
        %v1698 = vpack.c.bf16 %v1638, %v1637
        %v1699 = vpack.c.bf16 %v1640, %v1639
        %v1700 = vpack.c.bf16 %v1642, %v1641
        %v1701 = vpack.c.bf16 %v1644, %v1643
        %v1702 = vpack.c.bf16 %v1646, %v1645
        %v1703 = vpack.c.bf16 %v1648, %v1647
        %v1704 = vpack.c.bf16 %v1650, %v1649
        %v1705 = vpack.c.bf16 %v1652, %v1651
        %v1706 = vpack.c.bf16 %v1654, %v1653
        %v1707 = vpack.c.bf16 %v1656, %v1655
        %v1708 = vpack.c.bf16 %v1658, %v1657
        %v1709 = vpack.c.bf16 %v1660, %v1659
        %s1710 = scalar_lea.vmem %s4, 256
        %v1711 = vld [vmem:[%s1710] sm:$0xff]
        %v1712 = vld [vmem:[%s1710 + $0x8] sm:$0xff]
        %v1713 = vld [vmem:[%s1710 + $0x10] sm:$0xff]
        %v1714 = vld [vmem:[%s1710 + $0x18] sm:$0xff]
        %v1715 = vld [vmem:[%s1710 + $0x20] sm:$0xff]
        %v1716 = vld [vmem:[%s1710 + $0x28] sm:$0xff]
        %v1717 = vld [vmem:[%s1710 + $0x30] sm:$0xff]
        %v1718 = vld [vmem:[%s1710 + $0x38] sm:$0xff]
        %v1719 = vld [vmem:[%s1710 + $0x40] sm:$0xff]
        %v1720 = vld [vmem:[%s1710 + $0x48] sm:$0xff]
        %v1721 = vld [vmem:[%s1710 + $0x50] sm:$0xff]
        %v1722 = vld [vmem:[%s1710 + $0x58] sm:$0xff]
        %v1723 = vld [vmem:[%s1710 + $0x60] sm:$0xff]
        %v1724 = vld [vmem:[%s1710 + $0x68] sm:$0xff]
        %v1725 = vld [vmem:[%s1710 + $0x70] sm:$0xff]
        %v1726 = vld [vmem:[%s1710 + $0x78] sm:$0xff]
        %v1727 = vld [vmem:[%s1710 + $0x80] sm:$0xff]
        %v1728 = vld [vmem:[%s1710 + $0x88] sm:$0xff]
        %v1729 = vld [vmem:[%s1710 + $0x90] sm:$0xff]
        %v1730 = vld [vmem:[%s1710 + $0x98] sm:$0xff]
        %v1731 = vld [vmem:[%s1710 + $0xa0] sm:$0xff]
        %v1732 = vld [vmem:[%s1710 + $0xa8] sm:$0xff]
        %v1733 = vld [vmem:[%s1710 + $0xb0] sm:$0xff]
        %v1734 = vld [vmem:[%s1710 + $0xb8] sm:$0xff]
        %v1735 = vld [vmem:[%s1710 + $0xc0] sm:$0xff]
        %v1736 = vld [vmem:[%s1710 + $0xc8] sm:$0xff]
        %v1737 = vld [vmem:[%s1710 + $0xd0] sm:$0xff]
        %v1738 = vld [vmem:[%s1710 + $0xd8] sm:$0xff]
        %v1739 = vld [vmem:[%s1710 + $0xe0] sm:$0xff]
        %v1740 = vld [vmem:[%s1710 + $0xe8] sm:$0xff]
        %v1741 = vld [vmem:[%s1710 + $0xf0] sm:$0xff]
        %v1742 = vld [vmem:[%s1710 + $0xf8] sm:$0xff]
        %1744 = vset.pattern.permute.xlu0 0
        %1745 = vperm.xlu0 %1744, %v1711
        %v1746 = vpop.permute.xlu0 %1745
        %1749 = vset.pattern.permute.xlu0 0
        %1750 = vperm.xlu0 %1749, %v1712
        %v1751 = vpop.permute.xlu0 %1750
        %1754 = vset.pattern.permute.xlu0 0
        %1755 = vperm.xlu0 %1754, %v1713
        %v1756 = vpop.permute.xlu0 %1755
        %1759 = vset.pattern.permute.xlu0 0
        %1760 = vperm.xlu0 %1759, %v1714
        %v1761 = vpop.permute.xlu0 %1760
        %1764 = vset.pattern.permute.xlu0 0
        %1765 = vperm.xlu0 %1764, %v1715
        %v1766 = vpop.permute.xlu0 %1765
        %1769 = vset.pattern.permute.xlu0 0
        %1770 = vperm.xlu0 %1769, %v1716
        %v1771 = vpop.permute.xlu0 %1770
        %1774 = vset.pattern.permute.xlu0 0
        %1775 = vperm.xlu0 %1774, %v1717
        %v1776 = vpop.permute.xlu0 %1775
        %1779 = vset.pattern.permute.xlu0 0
        %1780 = vperm.xlu0 %1779, %v1718
        %v1781 = vpop.permute.xlu0 %1780
        %1784 = vset.pattern.permute.xlu0 0
        %1785 = vperm.xlu0 %1784, %v1719
        %v1786 = vpop.permute.xlu0 %1785
        %1789 = vset.pattern.permute.xlu0 0
        %1790 = vperm.xlu0 %1789, %v1720
        %v1791 = vpop.permute.xlu0 %1790
        %1794 = vset.pattern.permute.xlu0 0
        %1795 = vperm.xlu0 %1794, %v1721
        %v1796 = vpop.permute.xlu0 %1795
        %1799 = vset.pattern.permute.xlu0 0
        %1800 = vperm.xlu0 %1799, %v1722
        %v1801 = vpop.permute.xlu0 %1800
        %1804 = vset.pattern.permute.xlu0 0
        %1805 = vperm.xlu0 %1804, %v1723
        %v1806 = vpop.permute.xlu0 %1805
        %1809 = vset.pattern.permute.xlu0 0
        %1810 = vperm.xlu0 %1809, %v1724
        %v1811 = vpop.permute.xlu0 %1810
        %1814 = vset.pattern.permute.xlu0 0
        %1815 = vperm.xlu0 %1814, %v1725
        %v1816 = vpop.permute.xlu0 %1815
        %1819 = vset.pattern.permute.xlu0 0
        %1820 = vperm.xlu0 %1819, %v1726
        %v1821 = vpop.permute.xlu0 %1820
        %1824 = vset.pattern.permute.xlu0 0
        %1825 = vperm.xlu0 %1824, %v1727
        %v1826 = vpop.permute.xlu0 %1825
        %1829 = vset.pattern.permute.xlu0 0
        %1830 = vperm.xlu0 %1829, %v1728
        %v1831 = vpop.permute.xlu0 %1830
        %1834 = vset.pattern.permute.xlu0 0
        %1835 = vperm.xlu0 %1834, %v1729
        %v1836 = vpop.permute.xlu0 %1835
        %1839 = vset.pattern.permute.xlu0 0
        %1840 = vperm.xlu0 %1839, %v1730
        %v1841 = vpop.permute.xlu0 %1840
        %1844 = vset.pattern.permute.xlu0 0
        %1845 = vperm.xlu0 %1844, %v1731
        %v1846 = vpop.permute.xlu0 %1845
        %1849 = vset.pattern.permute.xlu0 0
        %1850 = vperm.xlu0 %1849, %v1732
        %v1851 = vpop.permute.xlu0 %1850
        %1854 = vset.pattern.permute.xlu0 0
        %1855 = vperm.xlu0 %1854, %v1733
        %v1856 = vpop.permute.xlu0 %1855
        %1859 = vset.pattern.permute.xlu0 0
        %1860 = vperm.xlu0 %1859, %v1734
        %v1861 = vpop.permute.xlu0 %1860
        %1864 = vset.pattern.permute.xlu0 0
        %1865 = vperm.xlu0 %1864, %v1735
        %v1866 = vpop.permute.xlu0 %1865
        %1869 = vset.pattern.permute.xlu0 0
        %1870 = vperm.xlu0 %1869, %v1736
        %v1871 = vpop.permute.xlu0 %1870
        %1874 = vset.pattern.permute.xlu0 0
        %1875 = vperm.xlu0 %1874, %v1737
        %v1876 = vpop.permute.xlu0 %1875
        %1879 = vset.pattern.permute.xlu0 0
        %1880 = vperm.xlu0 %1879, %v1738
        %v1881 = vpop.permute.xlu0 %1880
        %1884 = vset.pattern.permute.xlu0 0
        %1885 = vperm.xlu0 %1884, %v1739
        %v1886 = vpop.permute.xlu0 %1885
        %1889 = vset.pattern.permute.xlu0 0
        %1890 = vperm.xlu0 %1889, %v1740
        %v1891 = vpop.permute.xlu0 %1890
        %1894 = vset.pattern.permute.xlu0 0
        %1895 = vperm.xlu0 %1894, %v1741
        %v1896 = vpop.permute.xlu0 %1895
        %1899 = vset.pattern.permute.xlu0 0
        %1900 = vperm.xlu0 %1899, %v1742
        %v1901 = vpop.permute.xlu0 %1900
        %v1935 = vunpack.c.l.b16 %v1662
        %v1936 = vunpack.c.h.b16 %v1662
        %v1937 = vunpack.c.l.b16 %v1663
        %v1938 = vunpack.c.h.b16 %v1663
        %v1939 = vunpack.c.l.b16 %v1664
        %v1940 = vunpack.c.h.b16 %v1664
        %v1941 = vunpack.c.l.b16 %v1665
        %v1942 = vunpack.c.h.b16 %v1665
        %v1943 = vunpack.c.l.b16 %v1666
        %v1944 = vunpack.c.h.b16 %v1666
        %v1945 = vunpack.c.l.b16 %v1667
        %v1946 = vunpack.c.h.b16 %v1667
        %v1947 = vunpack.c.l.b16 %v1668
        %v1948 = vunpack.c.h.b16 %v1668
        %v1949 = vunpack.c.l.b16 %v1669
        %v1950 = vunpack.c.h.b16 %v1669
        %v1951 = vunpack.c.l.b16 %v1670
        %v1952 = vunpack.c.h.b16 %v1670
        %v1953 = vunpack.c.l.b16 %v1671
        %v1954 = vunpack.c.h.b16 %v1671
        %v1955 = vunpack.c.l.b16 %v1672
        %v1956 = vunpack.c.h.b16 %v1672
        %v1957 = vunpack.c.l.b16 %v1673
        %v1958 = vunpack.c.h.b16 %v1673
        %v1959 = vunpack.c.l.b16 %v1674
        %v1960 = vunpack.c.h.b16 %v1674
        %v1961 = vunpack.c.l.b16 %v1675
        %v1962 = vunpack.c.h.b16 %v1675
        %v1963 = vunpack.c.l.b16 %v1676
        %v1964 = vunpack.c.h.b16 %v1676
        %v1965 = vunpack.c.l.b16 %v1677
        %v1966 = vunpack.c.h.b16 %v1677
        %v1967 = vunpack.c.l.b16 %v1678
        %v1968 = vunpack.c.h.b16 %v1678
        %v1969 = vunpack.c.l.b16 %v1679
        %v1970 = vunpack.c.h.b16 %v1679
        %v1971 = vunpack.c.l.b16 %v1680
        %v1972 = vunpack.c.h.b16 %v1680
        %v1973 = vunpack.c.l.b16 %v1681
        %v1974 = vunpack.c.h.b16 %v1681
        %v1975 = vunpack.c.l.b16 %v1682
        %v1976 = vunpack.c.h.b16 %v1682
        %v1977 = vunpack.c.l.b16 %v1683
        %v1978 = vunpack.c.h.b16 %v1683
        %v1979 = vunpack.c.l.b16 %v1684
        %v1980 = vunpack.c.h.b16 %v1684
        %v1981 = vunpack.c.l.b16 %v1685
        %v1982 = vunpack.c.h.b16 %v1685
        %v1983 = vunpack.c.l.b16 %v1686
        %v1984 = vunpack.c.h.b16 %v1686
        %v1985 = vunpack.c.l.b16 %v1687
        %v1986 = vunpack.c.h.b16 %v1687
        %v1987 = vunpack.c.l.b16 %v1688
        %v1988 = vunpack.c.h.b16 %v1688
        %v1989 = vunpack.c.l.b16 %v1689
        %v1990 = vunpack.c.h.b16 %v1689
        %v1991 = vunpack.c.l.b16 %v1690
        %v1992 = vunpack.c.h.b16 %v1690
        %v1993 = vunpack.c.l.b16 %v1691
        %v1994 = vunpack.c.h.b16 %v1691
        %v1995 = vunpack.c.l.b16 %v1692
        %v1996 = vunpack.c.h.b16 %v1692
        %v1997 = vunpack.c.l.b16 %v1693
        %v1998 = vunpack.c.h.b16 %v1693
        %v1999 = vpack.c.b16 %v1937, %v1935
        %v2000 = vpack.c.b16 %v1938, %v1936
        %v2001 = vpack.c.b16 %v1941, %v1939
        %v2002 = vpack.c.b16 %v1942, %v1940
        %v2003 = vpack.c.b16 %v1945, %v1943
        %v2004 = vpack.c.b16 %v1946, %v1944
        %v2005 = vpack.c.b16 %v1949, %v1947
        %v2006 = vpack.c.b16 %v1950, %v1948
        %v2007 = vpack.c.b16 %v1953, %v1951
        %v2008 = vpack.c.b16 %v1954, %v1952
        %v2009 = vpack.c.b16 %v1957, %v1955
        %v2010 = vpack.c.b16 %v1958, %v1956
        %v2011 = vpack.c.b16 %v1961, %v1959
        %v2012 = vpack.c.b16 %v1962, %v1960
        %v2013 = vpack.c.b16 %v1965, %v1963
        %v2014 = vpack.c.b16 %v1966, %v1964
        %v2015 = vpack.c.b16 %v1969, %v1967
        %v2016 = vpack.c.b16 %v1970, %v1968
        %v2017 = vpack.c.b16 %v1973, %v1971
        %v2018 = vpack.c.b16 %v1974, %v1972
        %v2019 = vpack.c.b16 %v1977, %v1975
        %v2020 = vpack.c.b16 %v1978, %v1976
        %v2021 = vpack.c.b16 %v1981, %v1979
        %v2022 = vpack.c.b16 %v1982, %v1980
        %v2023 = vpack.c.b16 %v1985, %v1983
        %v2024 = vpack.c.b16 %v1986, %v1984
        %v2025 = vpack.c.b16 %v1989, %v1987
        %v2026 = vpack.c.b16 %v1990, %v1988
        %v2027 = vpack.c.b16 %v1993, %v1991
        %v2028 = vpack.c.b16 %v1994, %v1992
        %v2029 = vpack.c.b16 %v1997, %v1995
        %v2030 = vpack.c.b16 %v1998, %v1996
        %2063 = vmatprep.subr.bf16.mxu0 0
        %2064 = vmatpush1.bf16.msra.mxu0 %v1701
        %2065 = vmatprep.subr.bf16.mxu0 0
        %2066 = vmatpush1.bf16.msra.mxu0 %v1700
        %2067 = vmatprep.subr.bf16.mxu0 0
        %2068 = vmatpush1.bf16.msra.mxu0 %v1699
        %2069 = vmatprep.subr.bf16.mxu0 0
        %2070 = vmatpush1.bf16.msra.mxu0 %v1698
        %2071 = vmatprep.subr.bf16.mxu0 0
        %2072 = vmatpush1.bf16.msra.mxu0 %v1697
        %2073 = vmatprep.subr.bf16.mxu0 0
        %2074 = vmatpush1.bf16.msra.mxu0 %v1696
        %2075 = vmatprep.subr.bf16.mxu0 0
        %2076 = vmatpush1.bf16.msra.mxu0 %v1695
        %2077 = vmatprep.subr.bf16.mxu0 0
        %2078 = vmatpush1.bf16.msra.mxu0 %v1694
        %2079 = vmatprep.subr.bf16.mxu0 0
        %2080 = vmatpush2.bf16.msra.mxu0 %v1709
        %2081 = vmatprep.subr.bf16.mxu0 0
        %2082 = vmatpush2.bf16.msra.mxu0 %v1708
        %2083 = vmatprep.subr.bf16.mxu0 0
        %2084 = vmatpush2.bf16.msra.mxu0 %v1707
        %2085 = vmatprep.subr.bf16.mxu0 0
        %2086 = vmatpush2.bf16.msra.mxu0 %v1706
        %2087 = vmatprep.subr.bf16.mxu0 0
        %2088 = vmatpush2.bf16.msra.mxu0 %v1705
        %2089 = vmatprep.subr.bf16.mxu0 0
        %2090 = vmatpush2.bf16.msra.mxu0 %v1704
        %2091 = vmatprep.subr.bf16.mxu0 0
        %2092 = vmatpush2.bf16.msra.mxu0 %v1703
        %2093 = vmatprep.subr.bf16.mxu0 0
        %2094 = vmatpush2.bf16.msra.mxu0 %v1702
        %2095 = vmatprep.mubr.bf16.mxu0 %v2000
        %2096 = vmatmul.mubr.bf16.gmra.mxu0 %v1999
        %v2097 = vpop.f32.mrf.mxu0
        %v2098 = vadd.f32 %v1746, %v2097
        %v2099 = vpop.f32.mrf.mxu0
        %v2100 = vpop.f32.mrf.mxu0
        %v2101 = vadd.f32 %v1751, %v2100
        %v2102 = vpop.f32.mrf.mxu0
        %2103 = vmatprep.mubr.bf16.mxu0 %v2002
        %2104 = vmatmul.mubr.bf16.gmra.mxu0 %v2001
        %v2105 = vpop.f32.mrf.mxu0
        %v2106 = vadd.f32 %v1756, %v2105
        %v2107 = vpop.f32.mrf.mxu0
        %v2108 = vpop.f32.mrf.mxu0
        %v2109 = vadd.f32 %v1761, %v2108
        %v2110 = vpop.f32.mrf.mxu0
        %2111 = vmatprep.mubr.bf16.mxu0 %v2004
        %2112 = vmatmul.mubr.bf16.gmra.mxu0 %v2003
        %v2113 = vpop.f32.mrf.mxu0
        %v2114 = vadd.f32 %v1766, %v2113
        %v2115 = vpop.f32.mrf.mxu0
        %v2116 = vpop.f32.mrf.mxu0
        %v2117 = vadd.f32 %v1771, %v2116
        %v2118 = vpop.f32.mrf.mxu0
        %2119 = vmatprep.mubr.bf16.mxu0 %v2006
        %2120 = vmatmul.mubr.bf16.gmra.mxu0 %v2005
        %v2121 = vpop.f32.mrf.mxu0
        %v2122 = vadd.f32 %v1776, %v2121
        %v2123 = vpop.f32.mrf.mxu0
        %v2124 = vpop.f32.mrf.mxu0
        %v2125 = vadd.f32 %v1781, %v2124
        %v2126 = vpop.f32.mrf.mxu0
        %2127 = vmatprep.mubr.bf16.mxu0 %v2008
        %2128 = vmatmul.mubr.bf16.gmra.mxu0 %v2007
        %v2129 = vpop.f32.mrf.mxu0
        %v2130 = vadd.f32 %v1786, %v2129
        %v2131 = vpop.f32.mrf.mxu0
        %v2132 = vpop.f32.mrf.mxu0
        %v2133 = vadd.f32 %v1791, %v2132
        %v2134 = vpop.f32.mrf.mxu0
        %2135 = vmatprep.mubr.bf16.mxu0 %v2010
        %2136 = vmatmul.mubr.bf16.gmra.mxu0 %v2009
        %v2137 = vpop.f32.mrf.mxu0
        %v2138 = vadd.f32 %v1796, %v2137
        %v2139 = vpop.f32.mrf.mxu0
        %v2140 = vpop.f32.mrf.mxu0
        %v2141 = vadd.f32 %v1801, %v2140
        %v2142 = vpop.f32.mrf.mxu0
        %2143 = vmatprep.mubr.bf16.mxu0 %v2012
        %2144 = vmatmul.mubr.bf16.gmra.mxu0 %v2011
        %v2145 = vpop.f32.mrf.mxu0
        %v2146 = vadd.f32 %v1806, %v2145
        %v2147 = vpop.f32.mrf.mxu0
        %v2148 = vpop.f32.mrf.mxu0
        %v2149 = vadd.f32 %v1811, %v2148
        %v2150 = vpop.f32.mrf.mxu0
        %2151 = vmatprep.mubr.bf16.mxu0 %v2014
        %2152 = vmatmul.mubr.bf16.gmra.mxu0 %v2013
        %v2153 = vpop.f32.mrf.mxu0
        %v2154 = vadd.f32 %v1816, %v2153
        %v2155 = vpop.f32.mrf.mxu0
        %v2156 = vpop.f32.mrf.mxu0
        %v2157 = vadd.f32 %v1821, %v2156
        %v2158 = vpop.f32.mrf.mxu0
        %2159 = vmatprep.mubr.bf16.mxu0 %v2016
        %2160 = vmatmul.mubr.bf16.gmra.mxu0 %v2015
        %v2161 = vpop.f32.mrf.mxu0
        %v2162 = vadd.f32 %v1826, %v2161
        %v2163 = vpop.f32.mrf.mxu0
        %v2164 = vpop.f32.mrf.mxu0
        %v2165 = vadd.f32 %v1831, %v2164
        %v2166 = vpop.f32.mrf.mxu0
        %2167 = vmatprep.mubr.bf16.mxu0 %v2018
        %2168 = vmatmul.mubr.bf16.gmra.mxu0 %v2017
        %v2169 = vpop.f32.mrf.mxu0
        %v2170 = vadd.f32 %v1836, %v2169
        %v2171 = vpop.f32.mrf.mxu0
        %v2172 = vpop.f32.mrf.mxu0
        %v2173 = vadd.f32 %v1841, %v2172
        %v2174 = vpop.f32.mrf.mxu0
        %2175 = vmatprep.mubr.bf16.mxu0 %v2020
        %2176 = vmatmul.mubr.bf16.gmra.mxu0 %v2019
        %v2177 = vpop.f32.mrf.mxu0
        %v2178 = vadd.f32 %v1846, %v2177
        %v2179 = vpop.f32.mrf.mxu0
        %v2180 = vpop.f32.mrf.mxu0
        %v2181 = vadd.f32 %v1851, %v2180
        %v2182 = vpop.f32.mrf.mxu0
        %2183 = vmatprep.mubr.bf16.mxu0 %v2022
        %2184 = vmatmul.mubr.bf16.gmra.mxu0 %v2021
        %v2185 = vpop.f32.mrf.mxu0
        %v2186 = vadd.f32 %v1856, %v2185
        %v2187 = vpop.f32.mrf.mxu0
        %v2188 = vpop.f32.mrf.mxu0
        %v2189 = vadd.f32 %v1861, %v2188
        %v2190 = vpop.f32.mrf.mxu0
        %2191 = vmatprep.mubr.bf16.mxu0 %v2024
        %2192 = vmatmul.mubr.bf16.gmra.mxu0 %v2023
        %v2193 = vpop.f32.mrf.mxu0
        %v2194 = vadd.f32 %v1866, %v2193
        %v2195 = vpop.f32.mrf.mxu0
        %v2196 = vpop.f32.mrf.mxu0
        %v2197 = vadd.f32 %v1871, %v2196
        %v2198 = vpop.f32.mrf.mxu0
        %2199 = vmatprep.mubr.bf16.mxu0 %v2026
        %2200 = vmatmul.mubr.bf16.gmra.mxu0 %v2025
        %v2201 = vpop.f32.mrf.mxu0
        %v2202 = vadd.f32 %v1876, %v2201
        %v2203 = vpop.f32.mrf.mxu0
        %v2204 = vpop.f32.mrf.mxu0
        %v2205 = vadd.f32 %v1881, %v2204
        %v2206 = vpop.f32.mrf.mxu0
        %2207 = vmatprep.mubr.bf16.mxu0 %v2028
        %2208 = vmatmul.mubr.bf16.gmra.mxu0 %v2027
        %v2209 = vpop.f32.mrf.mxu0
        %v2210 = vadd.f32 %v1886, %v2209
        %v2211 = vpop.f32.mrf.mxu0
        %v2212 = vpop.f32.mrf.mxu0
        %v2213 = vadd.f32 %v1891, %v2212
        %v2214 = vpop.f32.mrf.mxu0
        %2215 = vmatprep.mubr.bf16.mxu0 %v2030
        %2216 = vmatmul.mubr.bf16.gmra.mxu0 %v2029
        %v2217 = vpop.f32.mrf.mxu0
        %v2218 = vadd.f32 %v1896, %v2217
        %v2219 = vpop.f32.mrf.mxu0
        %v2220 = vpop.f32.mrf.mxu0
        %v2221 = vadd.f32 %v1901, %v2220
        %v2222 = vpop.f32.mrf.mxu0
        %2223 = vdwg.mxu0
        %v2224 = vmax.f32 %v2098, 0.0
        %v2225 = vmax.f32 %v2101, 0.0
        %v2226 = vmax.f32 %v2106, 0.0
        %v2227 = vmax.f32 %v2109, 0.0
        %v2228 = vmax.f32 %v2114, 0.0
        %v2229 = vmax.f32 %v2117, 0.0
        %v2230 = vmax.f32 %v2122, 0.0
        %v2231 = vmax.f32 %v2125, 0.0
        %v2232 = vmax.f32 %v2130, 0.0
        %v2233 = vmax.f32 %v2133, 0.0
        %v2234 = vmax.f32 %v2138, 0.0
        %v2235 = vmax.f32 %v2141, 0.0
        %v2236 = vmax.f32 %v2146, 0.0
        %v2237 = vmax.f32 %v2149, 0.0
        %v2238 = vmax.f32 %v2154, 0.0
        %v2239 = vmax.f32 %v2157, 0.0
        %v2240 = vmax.f32 %v2162, 0.0
        %v2241 = vmax.f32 %v2165, 0.0
        %v2242 = vmax.f32 %v2170, 0.0
        %v2243 = vmax.f32 %v2173, 0.0
        %v2244 = vmax.f32 %v2178, 0.0
        %v2245 = vmax.f32 %v2181, 0.0
        %v2246 = vmax.f32 %v2186, 0.0
        %v2247 = vmax.f32 %v2189, 0.0
        %v2248 = vmax.f32 %v2194, 0.0
        %v2249 = vmax.f32 %v2197, 0.0
        %v2250 = vmax.f32 %v2202, 0.0
        %v2251 = vmax.f32 %v2205, 0.0
        %v2252 = vmax.f32 %v2210, 0.0
        %v2253 = vmax.f32 %v2213, 0.0
        %v2254 = vmax.f32 %v2218, 0.0
        %v2255 = vmax.f32 %v2221, 0.0
        %s2256 = scalar_lea.vmem %s3, 512
        %v2257 = vld [vmem:[%s2256] sm:$0xff]
        %v2258 = vld [vmem:[%s2256 + $0x8] sm:$0xff]
        %v2259 = vld [vmem:[%s2256 + $0x10] sm:$0xff]
        %v2260 = vld [vmem:[%s2256 + $0x18] sm:$0xff]
        %v2261 = vld [vmem:[%s2256 + $0x20] sm:$0xff]
        %v2262 = vld [vmem:[%s2256 + $0x28] sm:$0xff]
        %v2263 = vld [vmem:[%s2256 + $0x30] sm:$0xff]
        %v2264 = vld [vmem:[%s2256 + $0x38] sm:$0xff]
        %v2265 = vld [vmem:[%s2256 + $0x40] sm:$0xff]
        %v2266 = vld [vmem:[%s2256 + $0x48] sm:$0xff]
        %v2267 = vld [vmem:[%s2256 + $0x50] sm:$0xff]
        %v2268 = vld [vmem:[%s2256 + $0x58] sm:$0xff]
        %v2269 = vld [vmem:[%s2256 + $0x60] sm:$0xff]
        %v2270 = vld [vmem:[%s2256 + $0x68] sm:$0xff]
        %v2271 = vld [vmem:[%s2256 + $0x70] sm:$0xff]
        %v2272 = vld [vmem:[%s2256 + $0x78] sm:$0xff]
        %v2273 = vld [vmem:[%s2256 + $0x80] sm:$0xff]
        %v2274 = vld [vmem:[%s2256 + $0x88] sm:$0xff]
        %v2275 = vld [vmem:[%s2256 + $0x90] sm:$0xff]
        %v2276 = vld [vmem:[%s2256 + $0x98] sm:$0xff]
        %v2277 = vld [vmem:[%s2256 + $0xa0] sm:$0xff]
        %v2278 = vld [vmem:[%s2256 + $0xa8] sm:$0xff]
        %v2279 = vld [vmem:[%s2256 + $0xb0] sm:$0xff]
        %v2280 = vld [vmem:[%s2256 + $0xb8] sm:$0xff]
        %v2281 = vld [vmem:[%s2256 + $0xc0] sm:$0xff]
        %v2282 = vld [vmem:[%s2256 + $0xc8] sm:$0xff]
        %v2283 = vld [vmem:[%s2256 + $0xd0] sm:$0xff]
        %v2284 = vld [vmem:[%s2256 + $0xd8] sm:$0xff]
        %v2285 = vld [vmem:[%s2256 + $0xe0] sm:$0xff]
        %v2286 = vld [vmem:[%s2256 + $0xe8] sm:$0xff]
        %v2287 = vld [vmem:[%s2256 + $0xf0] sm:$0xff]
        %v2288 = vld [vmem:[%s2256 + $0xf8] sm:$0xff]
        %v2289 = vpack.c.bf16 %v2225, %v2224
        %v2290 = vpack.c.bf16 %v2227, %v2226
        %v2291 = vpack.c.bf16 %v2229, %v2228
        %v2292 = vpack.c.bf16 %v2231, %v2230
        %v2293 = vpack.c.bf16 %v2233, %v2232
        %v2294 = vpack.c.bf16 %v2235, %v2234
        %v2295 = vpack.c.bf16 %v2237, %v2236
        %v2296 = vpack.c.bf16 %v2239, %v2238
        %v2297 = vpack.c.bf16 %v2241, %v2240
        %v2298 = vpack.c.bf16 %v2243, %v2242
        %v2299 = vpack.c.bf16 %v2245, %v2244
        %v2300 = vpack.c.bf16 %v2247, %v2246
        %v2301 = vpack.c.bf16 %v2249, %v2248
        %v2302 = vpack.c.bf16 %v2251, %v2250
        %v2303 = vpack.c.bf16 %v2253, %v2252
        %v2304 = vpack.c.bf16 %v2255, %v2254
        %s2305 = scalar_lea.vmem %s4, 512
        %v2306 = vld [vmem:[%s2305] sm:$0xff]
        %v2307 = vld [vmem:[%s2305 + $0x8] sm:$0xff]
        %v2308 = vld [vmem:[%s2305 + $0x10] sm:$0xff]
        %v2309 = vld [vmem:[%s2305 + $0x18] sm:$0xff]
        %v2310 = vld [vmem:[%s2305 + $0x20] sm:$0xff]
        %v2311 = vld [vmem:[%s2305 + $0x28] sm:$0xff]
        %v2312 = vld [vmem:[%s2305 + $0x30] sm:$0xff]
        %v2313 = vld [vmem:[%s2305 + $0x38] sm:$0xff]
        %v2314 = vld [vmem:[%s2305 + $0x40] sm:$0xff]
        %v2315 = vld [vmem:[%s2305 + $0x48] sm:$0xff]
        %v2316 = vld [vmem:[%s2305 + $0x50] sm:$0xff]
        %v2317 = vld [vmem:[%s2305 + $0x58] sm:$0xff]
        %v2318 = vld [vmem:[%s2305 + $0x60] sm:$0xff]
        %v2319 = vld [vmem:[%s2305 + $0x68] sm:$0xff]
        %v2320 = vld [vmem:[%s2305 + $0x70] sm:$0xff]
        %v2321 = vld [vmem:[%s2305 + $0x78] sm:$0xff]
        %v2322 = vld [vmem:[%s2305 + $0x80] sm:$0xff]
        %v2323 = vld [vmem:[%s2305 + $0x88] sm:$0xff]
        %v2324 = vld [vmem:[%s2305 + $0x90] sm:$0xff]
        %v2325 = vld [vmem:[%s2305 + $0x98] sm:$0xff]
        %v2326 = vld [vmem:[%s2305 + $0xa0] sm:$0xff]
        %v2327 = vld [vmem:[%s2305 + $0xa8] sm:$0xff]
        %v2328 = vld [vmem:[%s2305 + $0xb0] sm:$0xff]
        %v2329 = vld [vmem:[%s2305 + $0xb8] sm:$0xff]
        %v2330 = vld [vmem:[%s2305 + $0xc0] sm:$0xff]
        %v2331 = vld [vmem:[%s2305 + $0xc8] sm:$0xff]
        %v2332 = vld [vmem:[%s2305 + $0xd0] sm:$0xff]
        %v2333 = vld [vmem:[%s2305 + $0xd8] sm:$0xff]
        %v2334 = vld [vmem:[%s2305 + $0xe0] sm:$0xff]
        %v2335 = vld [vmem:[%s2305 + $0xe8] sm:$0xff]
        %v2336 = vld [vmem:[%s2305 + $0xf0] sm:$0xff]
        %v2337 = vld [vmem:[%s2305 + $0xf8] sm:$0xff]
        %2339 = vset.pattern.permute.xlu0 0
        %2340 = vperm.xlu0 %2339, %v2306
        %v2341 = vpop.permute.xlu0 %2340
        %2344 = vset.pattern.permute.xlu0 0
        %2345 = vperm.xlu0 %2344, %v2307
        %v2346 = vpop.permute.xlu0 %2345
        %2349 = vset.pattern.permute.xlu0 0
        %2350 = vperm.xlu0 %2349, %v2308
        %v2351 = vpop.permute.xlu0 %2350
        %2354 = vset.pattern.permute.xlu0 0
        %2355 = vperm.xlu0 %2354, %v2309
        %v2356 = vpop.permute.xlu0 %2355
        %2359 = vset.pattern.permute.xlu0 0
        %2360 = vperm.xlu0 %2359, %v2310
        %v2361 = vpop.permute.xlu0 %2360
        %2364 = vset.pattern.permute.xlu0 0
        %2365 = vperm.xlu0 %2364, %v2311
        %v2366 = vpop.permute.xlu0 %2365
        %2369 = vset.pattern.permute.xlu0 0
        %2370 = vperm.xlu0 %2369, %v2312
        %v2371 = vpop.permute.xlu0 %2370
        %2374 = vset.pattern.permute.xlu0 0
        %2375 = vperm.xlu0 %2374, %v2313
        %v2376 = vpop.permute.xlu0 %2375
        %2379 = vset.pattern.permute.xlu0 0
        %2380 = vperm.xlu0 %2379, %v2314
        %v2381 = vpop.permute.xlu0 %2380
        %2384 = vset.pattern.permute.xlu0 0
        %2385 = vperm.xlu0 %2384, %v2315
        %v2386 = vpop.permute.xlu0 %2385
        %2389 = vset.pattern.permute.xlu0 0
        %2390 = vperm.xlu0 %2389, %v2316
        %v2391 = vpop.permute.xlu0 %2390
        %2394 = vset.pattern.permute.xlu0 0
        %2395 = vperm.xlu0 %2394, %v2317
        %v2396 = vpop.permute.xlu0 %2395
        %2399 = vset.pattern.permute.xlu0 0
        %2400 = vperm.xlu0 %2399, %v2318
        %v2401 = vpop.permute.xlu0 %2400
        %2404 = vset.pattern.permute.xlu0 0
        %2405 = vperm.xlu0 %2404, %v2319
        %v2406 = vpop.permute.xlu0 %2405
        %2409 = vset.pattern.permute.xlu0 0
        %2410 = vperm.xlu0 %2409, %v2320
        %v2411 = vpop.permute.xlu0 %2410
        %2414 = vset.pattern.permute.xlu0 0
        %2415 = vperm.xlu0 %2414, %v2321
        %v2416 = vpop.permute.xlu0 %2415
        %2419 = vset.pattern.permute.xlu0 0
        %2420 = vperm.xlu0 %2419, %v2322
        %v2421 = vpop.permute.xlu0 %2420
        %2424 = vset.pattern.permute.xlu0 0
        %2425 = vperm.xlu0 %2424, %v2323
        %v2426 = vpop.permute.xlu0 %2425
        %2429 = vset.pattern.permute.xlu0 0
        %2430 = vperm.xlu0 %2429, %v2324
        %v2431 = vpop.permute.xlu0 %2430
        %2434 = vset.pattern.permute.xlu0 0
        %2435 = vperm.xlu0 %2434, %v2325
        %v2436 = vpop.permute.xlu0 %2435
        %2439 = vset.pattern.permute.xlu0 0
        %2440 = vperm.xlu0 %2439, %v2326
        %v2441 = vpop.permute.xlu0 %2440
        %2444 = vset.pattern.permute.xlu0 0
        %2445 = vperm.xlu0 %2444, %v2327
        %v2446 = vpop.permute.xlu0 %2445
        %2449 = vset.pattern.permute.xlu0 0
        %2450 = vperm.xlu0 %2449, %v2328
        %v2451 = vpop.permute.xlu0 %2450
        %2454 = vset.pattern.permute.xlu0 0
        %2455 = vperm.xlu0 %2454, %v2329
        %v2456 = vpop.permute.xlu0 %2455
        %2459 = vset.pattern.permute.xlu0 0
        %2460 = vperm.xlu0 %2459, %v2330
        %v2461 = vpop.permute.xlu0 %2460
        %2464 = vset.pattern.permute.xlu0 0
        %2465 = vperm.xlu0 %2464, %v2331
        %v2466 = vpop.permute.xlu0 %2465
        %2469 = vset.pattern.permute.xlu0 0
        %2470 = vperm.xlu0 %2469, %v2332
        %v2471 = vpop.permute.xlu0 %2470
        %2474 = vset.pattern.permute.xlu0 0
        %2475 = vperm.xlu0 %2474, %v2333
        %v2476 = vpop.permute.xlu0 %2475
        %2479 = vset.pattern.permute.xlu0 0
        %2480 = vperm.xlu0 %2479, %v2334
        %v2481 = vpop.permute.xlu0 %2480
        %2484 = vset.pattern.permute.xlu0 0
        %2485 = vperm.xlu0 %2484, %v2335
        %v2486 = vpop.permute.xlu0 %2485
        %2489 = vset.pattern.permute.xlu0 0
        %2490 = vperm.xlu0 %2489, %v2336
        %v2491 = vpop.permute.xlu0 %2490
        %2494 = vset.pattern.permute.xlu0 0
        %2495 = vperm.xlu0 %2494, %v2337
        %v2496 = vpop.permute.xlu0 %2495
        %v2530 = vunpack.c.l.b16 %v2257
        %v2531 = vunpack.c.h.b16 %v2257
        %v2532 = vunpack.c.l.b16 %v2258
        %v2533 = vunpack.c.h.b16 %v2258
        %v2534 = vunpack.c.l.b16 %v2259
        %v2535 = vunpack.c.h.b16 %v2259
        %v2536 = vunpack.c.l.b16 %v2260
        %v2537 = vunpack.c.h.b16 %v2260
        %v2538 = vunpack.c.l.b16 %v2261
        %v2539 = vunpack.c.h.b16 %v2261
        %v2540 = vunpack.c.l.b16 %v2262
        %v2541 = vunpack.c.h.b16 %v2262
        %v2542 = vunpack.c.l.b16 %v2263
        %v2543 = vunpack.c.h.b16 %v2263
        %v2544 = vunpack.c.l.b16 %v2264
        %v2545 = vunpack.c.h.b16 %v2264
        %v2546 = vunpack.c.l.b16 %v2265
        %v2547 = vunpack.c.h.b16 %v2265
        %v2548 = vunpack.c.l.b16 %v2266
        %v2549 = vunpack.c.h.b16 %v2266
        %v2550 = vunpack.c.l.b16 %v2267
        %v2551 = vunpack.c.h.b16 %v2267
        %v2552 = vunpack.c.l.b16 %v2268
        %v2553 = vunpack.c.h.b16 %v2268
        %v2554 = vunpack.c.l.b16 %v2269
        %v2555 = vunpack.c.h.b16 %v2269
        %v2556 = vunpack.c.l.b16 %v2270
        %v2557 = vunpack.c.h.b16 %v2270
        %v2558 = vunpack.c.l.b16 %v2271
        %v2559 = vunpack.c.h.b16 %v2271
        %v2560 = vunpack.c.l.b16 %v2272
        %v2561 = vunpack.c.h.b16 %v2272
        %v2562 = vunpack.c.l.b16 %v2273
        %v2563 = vunpack.c.h.b16 %v2273
        %v2564 = vunpack.c.l.b16 %v2274
        %v2565 = vunpack.c.h.b16 %v2274
        %v2566 = vunpack.c.l.b16 %v2275
        %v2567 = vunpack.c.h.b16 %v2275
        %v2568 = vunpack.c.l.b16 %v2276
        %v2569 = vunpack.c.h.b16 %v2276
        %v2570 = vunpack.c.l.b16 %v2277
        %v2571 = vunpack.c.h.b16 %v2277
        %v2572 = vunpack.c.l.b16 %v2278
        %v2573 = vunpack.c.h.b16 %v2278
        %v2574 = vunpack.c.l.b16 %v2279
        %v2575 = vunpack.c.h.b16 %v2279
        %v2576 = vunpack.c.l.b16 %v2280
        %v2577 = vunpack.c.h.b16 %v2280
        %v2578 = vunpack.c.l.b16 %v2281
        %v2579 = vunpack.c.h.b16 %v2281
        %v2580 = vunpack.c.l.b16 %v2282
        %v2581 = vunpack.c.h.b16 %v2282
        %v2582 = vunpack.c.l.b16 %v2283
        %v2583 = vunpack.c.h.b16 %v2283
        %v2584 = vunpack.c.l.b16 %v2284
        %v2585 = vunpack.c.h.b16 %v2284
        %v2586 = vunpack.c.l.b16 %v2285
        %v2587 = vunpack.c.h.b16 %v2285
        %v2588 = vunpack.c.l.b16 %v2286
        %v2589 = vunpack.c.h.b16 %v2286
        %v2590 = vunpack.c.l.b16 %v2287
        %v2591 = vunpack.c.h.b16 %v2287
        %v2592 = vunpack.c.l.b16 %v2288
        %v2593 = vunpack.c.h.b16 %v2288
        %v2594 = vpack.c.b16 %v2532, %v2530
        %v2595 = vpack.c.b16 %v2533, %v2531
        %v2596 = vpack.c.b16 %v2536, %v2534
        %v2597 = vpack.c.b16 %v2537, %v2535
        %v2598 = vpack.c.b16 %v2540, %v2538
        %v2599 = vpack.c.b16 %v2541, %v2539
        %v2600 = vpack.c.b16 %v2544, %v2542
        %v2601 = vpack.c.b16 %v2545, %v2543
        %v2602 = vpack.c.b16 %v2548, %v2546
        %v2603 = vpack.c.b16 %v2549, %v2547
        %v2604 = vpack.c.b16 %v2552, %v2550
        %v2605 = vpack.c.b16 %v2553, %v2551
        %v2606 = vpack.c.b16 %v2556, %v2554
        %v2607 = vpack.c.b16 %v2557, %v2555
        %v2608 = vpack.c.b16 %v2560, %v2558
        %v2609 = vpack.c.b16 %v2561, %v2559
        %v2610 = vpack.c.b16 %v2564, %v2562
        %v2611 = vpack.c.b16 %v2565, %v2563
        %v2612 = vpack.c.b16 %v2568, %v2566
        %v2613 = vpack.c.b16 %v2569, %v2567
        %v2614 = vpack.c.b16 %v2572, %v2570
        %v2615 = vpack.c.b16 %v2573, %v2571
        %v2616 = vpack.c.b16 %v2576, %v2574
        %v2617 = vpack.c.b16 %v2577, %v2575
        %v2618 = vpack.c.b16 %v2580, %v2578
        %v2619 = vpack.c.b16 %v2581, %v2579
        %v2620 = vpack.c.b16 %v2584, %v2582
        %v2621 = vpack.c.b16 %v2585, %v2583
        %v2622 = vpack.c.b16 %v2588, %v2586
        %v2623 = vpack.c.b16 %v2589, %v2587
        %v2624 = vpack.c.b16 %v2592, %v2590
        %v2625 = vpack.c.b16 %v2593, %v2591
        %2658 = vmatprep.subr.bf16.mxu0 0
        %2659 = vmatpush1.bf16.msra.mxu0 %v2296
        %2660 = vmatprep.subr.bf16.mxu0 0
        %2661 = vmatpush1.bf16.msra.mxu0 %v2295
        %2662 = vmatprep.subr.bf16.mxu0 0
        %2663 = vmatpush1.bf16.msra.mxu0 %v2294
        %2664 = vmatprep.subr.bf16.mxu0 0
        %2665 = vmatpush1.bf16.msra.mxu0 %v2293
        %2666 = vmatprep.subr.bf16.mxu0 0
        %2667 = vmatpush1.bf16.msra.mxu0 %v2292
        %2668 = vmatprep.subr.bf16.mxu0 0
        %2669 = vmatpush1.bf16.msra.mxu0 %v2291
        %2670 = vmatprep.subr.bf16.mxu0 0
        %2671 = vmatpush1.bf16.msra.mxu0 %v2290
        %2672 = vmatprep.subr.bf16.mxu0 0
        %2673 = vmatpush1.bf16.msra.mxu0 %v2289
        %2674 = vmatprep.subr.bf16.mxu0 0
        %2675 = vmatpush2.bf16.msra.mxu0 %v2304
        %2676 = vmatprep.subr.bf16.mxu0 0
        %2677 = vmatpush2.bf16.msra.mxu0 %v2303
        %2678 = vmatprep.subr.bf16.mxu0 0
        %2679 = vmatpush2.bf16.msra.mxu0 %v2302
        %2680 = vmatprep.subr.bf16.mxu0 0
        %2681 = vmatpush2.bf16.msra.mxu0 %v2301
        %2682 = vmatprep.subr.bf16.mxu0 0
        %2683 = vmatpush2.bf16.msra.mxu0 %v2300
        %2684 = vmatprep.subr.bf16.mxu0 0
        %2685 = vmatpush2.bf16.msra.mxu0 %v2299
        %2686 = vmatprep.subr.bf16.mxu0 0
        %2687 = vmatpush2.bf16.msra.mxu0 %v2298
        %2688 = vmatprep.subr.bf16.mxu0 0
        %2689 = vmatpush2.bf16.msra.mxu0 %v2297
        %2690 = vmatprep.mubr.bf16.mxu0 %v2595
        %2691 = vmatmul.mubr.bf16.gmra.mxu0 %v2594
        %v2692 = vpop.f32.mrf.mxu0
        %v2693 = vadd.f32 %v2341, %v2692
        %v2694 = vpop.f32.mrf.mxu0
        %v2695 = vpop.f32.mrf.mxu0
        %v2696 = vadd.f32 %v2346, %v2695
        %v2697 = vpop.f32.mrf.mxu0
        %2698 = vmatprep.mubr.bf16.mxu0 %v2597
        %2699 = vmatmul.mubr.bf16.gmra.mxu0 %v2596
        %v2700 = vpop.f32.mrf.mxu0
        %v2701 = vadd.f32 %v2351, %v2700
        %v2702 = vpop.f32.mrf.mxu0
        %v2703 = vpop.f32.mrf.mxu0
        %v2704 = vadd.f32 %v2356, %v2703
        %v2705 = vpop.f32.mrf.mxu0
        %2706 = vmatprep.mubr.bf16.mxu0 %v2599
        %2707 = vmatmul.mubr.bf16.gmra.mxu0 %v2598
        %v2708 = vpop.f32.mrf.mxu0
        %v2709 = vadd.f32 %v2361, %v2708
        %v2710 = vpop.f32.mrf.mxu0
        %v2711 = vpop.f32.mrf.mxu0
        %v2712 = vadd.f32 %v2366, %v2711
        %v2713 = vpop.f32.mrf.mxu0
        %2714 = vmatprep.mubr.bf16.mxu0 %v2601
        %2715 = vmatmul.mubr.bf16.gmra.mxu0 %v2600
        %v2716 = vpop.f32.mrf.mxu0
        %v2717 = vadd.f32 %v2371, %v2716
        %v2718 = vpop.f32.mrf.mxu0
        %v2719 = vpop.f32.mrf.mxu0
        %v2720 = vadd.f32 %v2376, %v2719
        %v2721 = vpop.f32.mrf.mxu0
        %2722 = vmatprep.mubr.bf16.mxu0 %v2603
        %2723 = vmatmul.mubr.bf16.gmra.mxu0 %v2602
        %v2724 = vpop.f32.mrf.mxu0
        %v2725 = vadd.f32 %v2381, %v2724
        %v2726 = vpop.f32.mrf.mxu0
        %v2727 = vpop.f32.mrf.mxu0
        %v2728 = vadd.f32 %v2386, %v2727
        %v2729 = vpop.f32.mrf.mxu0
        %2730 = vmatprep.mubr.bf16.mxu0 %v2605
        %2731 = vmatmul.mubr.bf16.gmra.mxu0 %v2604
        %v2732 = vpop.f32.mrf.mxu0
        %v2733 = vadd.f32 %v2391, %v2732
        %v2734 = vpop.f32.mrf.mxu0
        %v2735 = vpop.f32.mrf.mxu0
        %v2736 = vadd.f32 %v2396, %v2735
        %v2737 = vpop.f32.mrf.mxu0
        %2738 = vmatprep.mubr.bf16.mxu0 %v2607
        %2739 = vmatmul.mubr.bf16.gmra.mxu0 %v2606
        %v2740 = vpop.f32.mrf.mxu0
        %v2741 = vadd.f32 %v2401, %v2740
        %v2742 = vpop.f32.mrf.mxu0
        %v2743 = vpop.f32.mrf.mxu0
        %v2744 = vadd.f32 %v2406, %v2743
        %v2745 = vpop.f32.mrf.mxu0
        %2746 = vmatprep.mubr.bf16.mxu0 %v2609
        %2747 = vmatmul.mubr.bf16.gmra.mxu0 %v2608
        %v2748 = vpop.f32.mrf.mxu0
        %v2749 = vadd.f32 %v2411, %v2748
        %v2750 = vpop.f32.mrf.mxu0
        %v2751 = vpop.f32.mrf.mxu0
        %v2752 = vadd.f32 %v2416, %v2751
        %v2753 = vpop.f32.mrf.mxu0
        %2754 = vmatprep.mubr.bf16.mxu0 %v2611
        %2755 = vmatmul.mubr.bf16.gmra.mxu0 %v2610
        %v2756 = vpop.f32.mrf.mxu0
        %v2757 = vadd.f32 %v2421, %v2756
        %v2758 = vpop.f32.mrf.mxu0
        %v2759 = vpop.f32.mrf.mxu0
        %v2760 = vadd.f32 %v2426, %v2759
        %v2761 = vpop.f32.mrf.mxu0
        %2762 = vmatprep.mubr.bf16.mxu0 %v2613
        %2763 = vmatmul.mubr.bf16.gmra.mxu0 %v2612
        %v2764 = vpop.f32.mrf.mxu0
        %v2765 = vadd.f32 %v2431, %v2764
        %v2766 = vpop.f32.mrf.mxu0
        %v2767 = vpop.f32.mrf.mxu0
        %v2768 = vadd.f32 %v2436, %v2767
        %v2769 = vpop.f32.mrf.mxu0
        %2770 = vmatprep.mubr.bf16.mxu0 %v2615
        %2771 = vmatmul.mubr.bf16.gmra.mxu0 %v2614
        %v2772 = vpop.f32.mrf.mxu0
        %v2773 = vadd.f32 %v2441, %v2772
        %v2774 = vpop.f32.mrf.mxu0
        %v2775 = vpop.f32.mrf.mxu0
        %v2776 = vadd.f32 %v2446, %v2775
        %v2777 = vpop.f32.mrf.mxu0
        %2778 = vmatprep.mubr.bf16.mxu0 %v2617
        %2779 = vmatmul.mubr.bf16.gmra.mxu0 %v2616
        %v2780 = vpop.f32.mrf.mxu0
        %v2781 = vadd.f32 %v2451, %v2780
        %v2782 = vpop.f32.mrf.mxu0
        %v2783 = vpop.f32.mrf.mxu0
        %v2784 = vadd.f32 %v2456, %v2783
        %v2785 = vpop.f32.mrf.mxu0
        %2786 = vmatprep.mubr.bf16.mxu0 %v2619
        %2787 = vmatmul.mubr.bf16.gmra.mxu0 %v2618
        %v2788 = vpop.f32.mrf.mxu0
        %v2789 = vadd.f32 %v2461, %v2788
        %v2790 = vpop.f32.mrf.mxu0
        %v2791 = vpop.f32.mrf.mxu0
        %v2792 = vadd.f32 %v2466, %v2791
        %v2793 = vpop.f32.mrf.mxu0
        %2794 = vmatprep.mubr.bf16.mxu0 %v2621
        %2795 = vmatmul.mubr.bf16.gmra.mxu0 %v2620
        %v2796 = vpop.f32.mrf.mxu0
        %v2797 = vadd.f32 %v2471, %v2796
        %v2798 = vpop.f32.mrf.mxu0
        %v2799 = vpop.f32.mrf.mxu0
        %v2800 = vadd.f32 %v2476, %v2799
        %v2801 = vpop.f32.mrf.mxu0
        %2802 = vmatprep.mubr.bf16.mxu0 %v2623
        %2803 = vmatmul.mubr.bf16.gmra.mxu0 %v2622
        %v2804 = vpop.f32.mrf.mxu0
        %v2805 = vadd.f32 %v2481, %v2804
        %v2806 = vpop.f32.mrf.mxu0
        %v2807 = vpop.f32.mrf.mxu0
        %v2808 = vadd.f32 %v2486, %v2807
        %v2809 = vpop.f32.mrf.mxu0
        %2810 = vmatprep.mubr.bf16.mxu0 %v2625
        %2811 = vmatmul.mubr.bf16.gmra.mxu0 %v2624
        %v2812 = vpop.f32.mrf.mxu0
        %v2813 = vadd.f32 %v2491, %v2812
        %v2814 = vpop.f32.mrf.mxu0
        %v2815 = vpop.f32.mrf.mxu0
        %v2816 = vadd.f32 %v2496, %v2815
        %v2817 = vpop.f32.mrf.mxu0
        %2818 = vdwg.mxu0
        %v2819 = vmax.f32 %v2693, 0.0
        %v2820 = vmax.f32 %v2696, 0.0
        %v2821 = vmax.f32 %v2701, 0.0
        %v2822 = vmax.f32 %v2704, 0.0
        %v2823 = vmax.f32 %v2709, 0.0
        %v2824 = vmax.f32 %v2712, 0.0
        %v2825 = vmax.f32 %v2717, 0.0
        %v2826 = vmax.f32 %v2720, 0.0
        %v2827 = vmax.f32 %v2725, 0.0
        %v2828 = vmax.f32 %v2728, 0.0
        %v2829 = vmax.f32 %v2733, 0.0
        %v2830 = vmax.f32 %v2736, 0.0
        %v2831 = vmax.f32 %v2741, 0.0
        %v2832 = vmax.f32 %v2744, 0.0
        %v2833 = vmax.f32 %v2749, 0.0
        %v2834 = vmax.f32 %v2752, 0.0
        %v2835 = vmax.f32 %v2757, 0.0
        %v2836 = vmax.f32 %v2760, 0.0
        %v2837 = vmax.f32 %v2765, 0.0
        %v2838 = vmax.f32 %v2768, 0.0
        %v2839 = vmax.f32 %v2773, 0.0
        %v2840 = vmax.f32 %v2776, 0.0
        %v2841 = vmax.f32 %v2781, 0.0
        %v2842 = vmax.f32 %v2784, 0.0
        %v2843 = vmax.f32 %v2789, 0.0
        %v2844 = vmax.f32 %v2792, 0.0
        %v2845 = vmax.f32 %v2797, 0.0
        %v2846 = vmax.f32 %v2800, 0.0
        %v2847 = vmax.f32 %v2805, 0.0
        %v2848 = vmax.f32 %v2808, 0.0
        %v2849 = vmax.f32 %v2813, 0.0
        %v2850 = vmax.f32 %v2816, 0.0
        %v2851 = vld [vmem:[%s5] sm:$0x3]
        %v2852 = vpack.c.bf16 %v2820, %v2819
        %v2853 = vpack.c.bf16 %v2822, %v2821
        %v2854 = vpack.c.bf16 %v2824, %v2823
        %v2855 = vpack.c.bf16 %v2826, %v2825
        %v2856 = vpack.c.bf16 %v2828, %v2827
        %v2857 = vpack.c.bf16 %v2830, %v2829
        %v2858 = vpack.c.bf16 %v2832, %v2831
        %v2859 = vpack.c.bf16 %v2834, %v2833
        %v2860 = vpack.c.bf16 %v2836, %v2835
        %v2861 = vpack.c.bf16 %v2838, %v2837
        %v2862 = vpack.c.bf16 %v2840, %v2839
        %v2863 = vpack.c.bf16 %v2842, %v2841
        %v2864 = vpack.c.bf16 %v2844, %v2843
        %v2865 = vpack.c.bf16 %v2846, %v2845
        %v2866 = vpack.c.bf16 %v2848, %v2847
        %v2867 = vpack.c.bf16 %v2850, %v2849
        %v2868 = vld [vmem:[#allocation3] sm:$0x1]
        %2870 = vset.pattern.permute.xlu0 0
        %2871 = vperm.xlu0 %2870, %v2868
        %v2872 = vpop.permute.xlu0 %2871
        %v2874 = vlaneseq
        %v2875 = vshrl.u32 %v2874, 7
        %v2876 = vsub.s32 0, %v2875
        %v2877 = vrot.slane %v2872, %v2876
        %v2880 = vunpack.c.l.s4 1966171168
        %v2881 = vunpack.c.0.s8 %v2880
        %v2882 = vlaneseq
        %v2883 = vshrl.u32 %v2882, 7
        %v2884 = vsub.s32 %v2881, %v2883
        %v2885 = vrot.slane %v2851, %v2884
        %v2886 = vcombine.high %v2885, %v2885
        %v2888 = vunpack.c.l.s4 1966171168
        %v2889 = vunpack.c.0.s8 %v2888
        %v2890 = vlaneseq
        %v2891 = vshrl.u32 %v2890, 7
        %v2892 = vsub.s32 %v2889, %v2891
        %v2893 = vrot.slane %v2885, %v2892
        %v2895 = vunpack.c.l.s4 1966171168
        %v2896 = vunpack.c.0.s8 %v2895
        %v2897 = vlaneseq
        %v2898 = vshrl.u32 %v2897, 7
        %v2899 = vsub.s32 %v2896, %v2898
        %v2900 = vrot.slane %v2886, %v2899
        %2903 = vmatprep.subr.bf16.mxu0 0
        %2904 = vmatpush1.bf16.msra.mxu0 %v2859
        %2905 = vmatprep.subr.bf16.mxu0 0
        %2906 = vmatpush1.bf16.msra.mxu0 %v2858
        %2907 = vmatprep.subr.bf16.mxu0 0
        %2908 = vmatpush1.bf16.msra.mxu0 %v2857
        %2909 = vmatprep.subr.bf16.mxu0 0
        %2910 = vmatpush1.bf16.msra.mxu0 %v2856
        %2911 = vmatprep.subr.bf16.mxu0 0
        %2912 = vmatpush1.bf16.msra.mxu0 %v2855
        %2913 = vmatprep.subr.bf16.mxu0 0
        %2914 = vmatpush1.bf16.msra.mxu0 %v2854
        %2915 = vmatprep.subr.bf16.mxu0 0
        %2916 = vmatpush1.bf16.msra.mxu0 %v2853
        %2917 = vmatprep.subr.bf16.mxu0 0
        %2918 = vmatpush1.bf16.msra.mxu0 %v2852
        %2919 = vmatprep.subr.bf16.mxu0 0
        %2920 = vmatpush2.bf16.msra.mxu0 %v2867
        %2921 = vmatprep.subr.bf16.mxu0 0
        %2922 = vmatpush2.bf16.msra.mxu0 %v2866
        %2923 = vmatprep.subr.bf16.mxu0 0
        %2924 = vmatpush2.bf16.msra.mxu0 %v2865
        %2925 = vmatprep.subr.bf16.mxu0 0
        %2926 = vmatpush2.bf16.msra.mxu0 %v2864
        %2927 = vmatprep.subr.bf16.mxu0 0
        %2928 = vmatpush2.bf16.msra.mxu0 %v2863
        %2929 = vmatprep.subr.bf16.mxu0 0
        %2930 = vmatpush2.bf16.msra.mxu0 %v2862
        %2931 = vmatprep.subr.bf16.mxu0 0
        %2932 = vmatpush2.bf16.msra.mxu0 %v2861
        %2933 = vmatprep.subr.bf16.mxu0 0
        %2934 = vmatpush2.bf16.msra.mxu0 %v2860
        %2935 = vmatprep.mubr.bf16.mxu0 %v2900
        %2936 = vmatmul.mubr.bf16.gmra.mxu0 %v2893
        %v2937 = vpop.f32.mrf.mxu0
        %v2938 = vadd.f32 %v2877, %v2937
        %v2939 = vpop.f32.mrf.mxu0
        %v2940 = vpop.f32.mrf.mxu0
        %v2941 = vpop.f32.mrf.mxu0
        %2942 = vdwg.mxu0
        %2943 = vst [vmem:[%s270] sm:$0x1] %v2938
        %s2944 = sand.u32 %s183, 1
        %s2945 = scalar_lea.sflag [#allocation5], %s2944
        %s2946 = sand.u32 %s183, 1
        %s2947 = scalar_lea.vmem [#allocation4], %s2946
        // Predicated region
        $region49: #{tpu_custom_call.1} parent=47 // pred_check
          %p2948 = pneg %p193
        $region50: #{tpu_custom_call.1} parent=47 // pred_check_branch
          %2950 = sbr.rel (%p2948) target = $region52
        $region51: #{tpu_custom_call.1} parent=47 // pred_region
          %s2952 = ssub.s32 16, 16
          %2953 = vsyncadd %s2945, %s2952
          %s2954 = smul.addr %s23, 16
          %s2955 = scalar_lea.hbm %s7, %s2954
          %s2957 = sshll.u32 %s2947, 4
          %s2958 = int_to_ptr.vmem [resolvable:$true] %s2957
          %2960 = dma.vmem_to_hbm [thread:$0]  %s2958, 16, %s2955, %s2945
        $region52: #{tpu_custom_call.1} parent=47 // pred_fallthru
          _
      $region48: #{tpu_custom_call.1} parent=5 // pred_fallthru
        _
      %p2961 = scmp.le.s32.totalorder 2, %s18
      // Predicated region
      $region53: #{tpu_custom_call.1} parent=5 // pred_check
        %p2962 = pneg %p2961
      $region54: #{tpu_custom_call.1} parent=5 // pred_check_branch
        %2964 = sbr.rel (%p2962) target = $region56
      $region55: #{tpu_custom_call.1} parent=5 // pred_region
        %s2965 = ssub.s32 %s18, 2
        // Predicated region
        $region57: #{tpu_custom_call.1} parent=55 // pred_check
          %p2966 = pneg %p199
        $region58: #{tpu_custom_call.1} parent=55 // pred_check_branch
          %2968 = sbr.rel (%p2966) target = $region60
        $region59: #{tpu_custom_call.1} parent=55 // pred_region
          %s2969 = sand.u32 %s184, 1
          %s2970 = scalar_lea.sflag [#allocation5], %s2969
          %s2971 = sand.u32 %s184, 1
          %s2972 = scalar_lea.vmem [#allocation4], %s2971
          %2973 = dma.done %s2970, 16
        $region60: #{tpu_custom_call.1} parent=55 // pred_fallthru
          _
      $region56: #{tpu_custom_call.1} parent=5 // pred_fallthru
        _
    $region6: #{tpu_custom_call.1} parent=1 // loop_footer
      %s22 = sadd.s32 1, %s18
    $region7: #{tpu_custom_call.1} parent=1 // loop_footer_branch
      %17 = sbr.rel target = $region3
    $region8: #{tpu_custom_call.1} parent=1 // loop_exit
      _
    %2974 = vsyncpa [#allocation5], 1
    %s2975 = scalar_lea.sflag [#allocation5], 1
    %2976 = vsyncpa %s2975, 1

</llo_original>
